<compile_context>
chip_gen: v7x
topology: tpu7x:2x2x1
jax: 0.10.0
libtpu: 0.0.40
codegen_flags: <defaults>
</compile_context>

<pallas_src>
import functools

import jax
import jax.numpy as jnp
from jax.experimental import pallas as pl
from jax.experimental.pallas import tpu as pltpu

# ---------------------------------------------------------------------------
# dimensions (small, consistent with the module's heads)
# ---------------------------------------------------------------------------
IN_DIM = 5            # point cloud columns: x, y, z, batch_id, value
H = 32                # backbone hidden width
EMB = 3               # spatial embedding dim
FEAT = 16             # feature embedding dim
COV = 2               # covariance dim
OCC = 1               # occupancy dim
SEG = 5               # semantic classes
HEAD = EMB + FEAT + COV + OCC + SEG   # 27 packed head outputs
SPATIAL_SIZE = 16.0

N_POINTS = 256
BATCH = 2
PTS_PER_BATCH = N_POINTS // BATCH               # 128
CLUSTERS_PER_BATCH = 16
PTS_PER_CLUSTER = PTS_PER_BATCH // CLUSTERS_PER_BATCH   # 8
V_NODES = BATCH * CLUSTERS_PER_BATCH            # 32
NODE_DIM = EMB + FEAT + COV + OCC               # 22
GNN_H = 32
NODE_CLASSES = 5
EDGE_CLASSES = 2
EDGES_PER_BATCH = CLUSTERS_PER_BATCH * (CLUSTERS_PER_BATCH - 1)   # 240
E_EDGES = BATCH * EDGES_PER_BATCH               # 480
NODE_OUT = NODE_CLASSES + NODE_DIM              # 27  (node_pred | node_x)
EDGE_OUT = EDGE_CLASSES + NODE_DIM              # 24  (edge_pred | edge_attr)

SLAB_W = 128          # lane width of the packed parameter/constant slab
ROW_ALIGN = 16        # bf16 sublane tile
LANE_ALIGN = 8        # column alignment inside the slab
A_SPLIT = 128         # lane split of the [16,240] dst-incidence matrix


def _ceil(n, m):
    return ((n + m - 1) // m) * m


# ---------------------------------------------------------------------------
# Compile-time constants: pooling / fused edge-selection / incidence matrices
# (identical for every batch, built once — never rebuilt per forward call)
# ---------------------------------------------------------------------------
def build_constants():
    src_loc, dst_loc, src_g, dst_g = [], [], [], []
    for b in range(BATCH):
        for i in range(CLUSTERS_PER_BATCH):
            for j in range(CLUSTERS_PER_BATCH):
                if i != j:
                    if b == 0:
                        src_loc.append(i)
                        dst_loc.append(j)
                    src_g.append(b * CLUSTERS_PER_BATCH + i)
                    dst_g.append(b * CLUSTERS_PER_BATCH + j)
    src_loc = jnp.asarray(src_loc, jnp.int32)
    dst_loc = jnp.asarray(dst_loc, jnp.int32)
    edge_index = jnp.stack([jnp.asarray(src_g, jnp.int32),
                            jnp.asarray(dst_g, jnp.int32)])              # [2,480]

    node_ids = jnp.arange(CLUSTERS_PER_BATCH, dtype=jnp.int32)
    p_src = (src_loc[:, None] == node_ids[None, :]).astype(jnp.float32)  # [240,16]
    p_dst = (dst_loc[:, None] == node_ids[None, :]).astype(jnp.float32)  # [240,16]
    ps_pd = jnp.concatenate([p_src, p_dst], axis=1)                      # [240,32]
    a_inc = p_dst.T                                                      # [16,240]

    point_cluster = jnp.repeat(node_ids, PTS_PER_CLUSTER)                # [128]
    pool = (node_ids[:, None] == point_cluster[None, :]).astype(jnp.float32)
    pool = pool / float(PTS_PER_CLUSTER)                                 # [16,128] mean

    # coordinate selection: x[128,5] @ csel -> coords/SPATIAL_SIZE in lanes 0:3
    csel = jnp.zeros((IN_DIM, HEAD), jnp.float32)
    csel = csel.at[0, 0].set(1.0 / SPATIAL_SIZE)
    csel = csel.at[1, 1].set(1.0 / SPATIAL_SIZE)
    csel = csel.at[2, 2].set(1.0 / SPATIAL_SIZE)

    consts = {"pool": pool, "ps_pd": ps_pd, "csel": csel,
              "a_lo": a_inc[:, :A_SPLIT], "a_hi": a_inc[:, A_SPLIT:]}
    return consts, edge_index


# ---------------------------------------------------------------------------
# Parameter init (deterministic, synthetic)
# ---------------------------------------------------------------------------
def init_params(key):
    ks = jax.random.split(key, 10)
    w = lambda k, s: 0.1 * jax.random.normal(k, s, jnp.float32)
    z = lambda s: jnp.zeros(s, jnp.float32)
    return {
        # backbone (point-wise MLP stand-in for the UResNet)
        "w1": w(ks[0], (IN_DIM, H)), "b1": z((1, H)),
        "w2": w(ks[1], (H, H)),      "b2": z((1, H)),
        "wh": w(ks[2], (H, HEAD)),   "bh": z((1, HEAD)),
        # gnn edge model (takes [x_src, x_dst, x_src - x_dst])
        "we1": w(ks[3], (3 * NODE_DIM, GNN_H)), "be1": z((1, GNN_H)),
        "we2": w(ks[4], (GNN_H, EDGE_CLASSES)), "be2": z((1, EDGE_CLASSES)),
        # gnn node model (split input weight: node feats / aggregated messages)
        "wn1a": w(ks[5], (NODE_DIM, GNN_H)),
        "wn1b": w(ks[6], (GNN_H, GNN_H)),
        "bn1": z((1, GNN_H)),
        "wn2": w(ks[7], (GNN_H, NODE_CLASSES)), "bn2": z((1, NODE_CLASSES)),
    }


# ---------------------------------------------------------------------------
# Pack all weights + constant matrices into ONE lane-packed bf16 slab.
# Greedy shelf packer: 16-row-aligned shelves, 8-lane-aligned columns.
# ---------------------------------------------------------------------------
def pack_slab(params, consts):
    # Fold the [x_src | x_dst | x_src - x_dst] concat into the first edge-MLP
    # weight and lane-concat the halves so layer 1 runs as one per-node matmul.
    # NOTE: folding in f32 then casting to bf16 differs from casting we1 first
    # by <= 1 ulp(bf16); acceptable for inference.
    we1 = params["we1"]
    w_src = we1[:NODE_DIM] + we1[2 * NODE_DIM:]
    w_dst = we1[NODE_DIM:2 * NODE_DIM] - we1[2 * NODE_DIM:]
    w_sd = jnp.concatenate([w_src, w_dst], axis=1)                     # [22,64]
    wn1 = jnp.concatenate([params["wn1a"], params["wn1b"]], axis=0)    # [54,32]

    entries = [
        ("ps_pd", consts["ps_pd"]),
        ("a_lo", consts["a_lo"]), ("a_hi", consts["a_hi"]),
        ("pool", consts["pool"]),
        ("wn1", wn1), ("w_sd", w_sd),
        ("w2", params["w2"]), ("wh", params["wh"]),
        ("we2", params["we2"]), ("wn2", params["wn2"]),
        ("w1", params["w1"]), ("csel", consts["csel"]),
        ("b1", params["b1"]), ("b2", params["b2"]), ("bh", params["bh"]),
        ("be1", params["be1"]), ("be2", params["be2"]),
        ("bn1", params["bn1"]), ("bn2", params["bn2"]),
    ]

    shelves = []          # each: [row_off, height, lane_cursor]
    offsets = {}          # name -> (row_off, col_off, rows, cols)
    next_row = 0
    for name, a in entries:
        r, c = a.shape
        h = _ceil(r, ROW_ALIGN)
        w = _ceil(c, LANE_ALIGN)
        slot = None
        for sh in shelves:
            if h <= sh[1] and sh[2] + w <= SLAB_W:
                slot = sh
                break
        if slot is None:
            slot = [next_row, h, 0]
            shelves.append(slot)
            next_row += h
        offsets[name] = (slot[0], slot[2], r, c)
        slot[2] += w

    slab = jnp.zeros((next_row, SLAB_W), jnp.bfloat16)
    for name, a in entries:
        r0, c0, r, c = offsets[name]
        slab = slab.at[r0:r0 + r, c0:c0 + c].set(a.astype(jnp.bfloat16))
    return slab, offsets


# ---------------------------------------------------------------------------
# The single fused kernel: one grid step == one batch's sub-problem
# ---------------------------------------------------------------------------
def fused_kernel(offsets, x_ref, slab_ref, head_ref, node_ref, edge_ref):
    f32, bf16 = jnp.float32, jnp.bfloat16

    def W(name):                          # bf16 weight / constant slice
        r0, c0, r, c = offsets[name]
        return slab_ref[r0:r0 + r, c0:c0 + c]

    def B(name):                          # f32 bias row [1, c]
        r0, c0, r, c = offsets[name]
        return slab_ref[r0:r0 + r, c0:c0 + c].astype(f32)

    x = x_ref[...]                        # [128, 5] f32 (x, y, z, batch_id, value)
    xb = x.astype(bf16)

    # --- SparseOccuSeg backbone (point-wise MLP) + fused heads -------------
    h = jnp.dot(xb, W("w1"), preferred_element_type=f32) + B("b1")
    h = jnp.maximum(h, 0.0).astype(bf16)
    h = jnp.dot(h, W("w2"), preferred_element_type=f32) + B("b2")
    h = jnp.maximum(h, 0.0).astype(bf16)
    y = jnp.dot(h, W("wh"), preferred_element_type=f32) + B("bh")     # [128,27]

    # coords/spatial_size routed into the 3 spatial-embedding lanes via a
    # tiny constant selection matmul (replaces the nested where chain).
    coord = jnp.dot(xb, W("csel"), preferred_element_type=f32)        # [128,27]
    col = jax.lax.broadcasted_iota(jnp.int32, (PTS_PER_BATCH, HEAD), 1)
    sp_mask = col < EMB
    cov_mask = (col >= EMB + FEAT) & (col < EMB + FEAT + COV)
    head = jnp.where(sp_mask, jnp.tanh(y) + coord,                    # spatial
                     jnp.where(cov_mask, 2.0 * jax.nn.sigmoid(y), y))
    head_ref[...] = head

    # --- GraphDataConstructor: fixed cluster-mean pooling (constant matmul) -
    feats = head[:, :NODE_DIM].astype(bf16)                           # [128,22]
    node_x = jnp.dot(W("pool"), feats, preferred_element_type=f32)    # [16,22]
    nxb = node_x.astype(bf16)

    # --- GNN edge model: layer 1 + edge_attr in ONE fused selection matmul --
    # proj = node_x @ [w_src | w_dst]   (concat-fold of [x_s|x_d|x_s-x_d]@we1)
    proj = jnp.dot(nxb, W("w_sd"), preferred_element_type=f32).astype(bf16)
    rhs = jnp.concatenate(
        [jnp.concatenate([proj[:, :GNN_H], nxb], axis=1),
         jnp.concatenate([proj[:, GNN_H:], -nxb], axis=1)], axis=0)   # [32,54]
    fused = jnp.dot(W("ps_pd"), rhs, preferred_element_type=f32)      # [240,54]
    e1 = jnp.maximum(fused[:, :GNN_H] + B("be1"), 0.0)                # [240,32]
    edge_attr = fused[:, GNN_H:GNN_H + NODE_DIM]                      # [240,22]
    e1b = e1.astype(bf16)
    edge_pred = jnp.dot(e1b, W("we2"), preferred_element_type=f32) + B("be2")
    edge_ref[...] = jnp.concatenate([edge_pred, edge_attr], axis=1)   # [240,24]

    # --- GNN node model: sum-aggregate incoming edge messages ---------------
    agg = (jnp.dot(W("a_lo"), e1b[:A_SPLIT], preferred_element_type=f32)
           + jnp.dot(W("a_hi"), e1b[A_SPLIT:], preferred_element_type=f32))
    n_in = jnp.concatenate([nxb, agg.astype(bf16)], axis=1)           # [16,54]
    n1 = jnp.maximum(jnp.dot(n_in, W("wn1"), preferred_element_type=f32)
                     + B("bn1"), 0.0).astype(bf16)
    node_pred = jnp.dot(n1, W("wn2"), preferred_element_type=f32) + B("bn2")
    node_ref[...] = jnp.concatenate([node_pred, node_x], axis=1)      # [16,27]


# ---------------------------------------------------------------------------
# Forward builder (single pallas_call; grid over batches, "parallel")
# ---------------------------------------------------------------------------
def build_forward(slab_shape, offsets, edge_index):
    kernel = functools.partial(fused_kernel, offsets)

    call = pl.pallas_call(
        kernel,
        out_shape=(
            jax.ShapeDtypeStruct((N_POINTS, HEAD), jnp.float32),      # head
            jax.ShapeDtypeStruct((V_NODES, NODE_OUT), jnp.float32),   # pred|x
            jax.ShapeDtypeStruct((E_EDGES, EDGE_OUT), jnp.float32),   # pred|attr
        ),
        grid=(BATCH,),
        in_specs=[
            pl.BlockSpec((PTS_PER_BATCH, IN_DIM), lambda b: (b, 0)),
            # whole slab; constant block index => fetched once, stays resident
            pl.BlockSpec(slab_shape, lambda b: (0, 0)),
        ],
        out_specs=(
            pl.BlockSpec((PTS_PER_BATCH, HEAD), lambda b: (b, 0)),
            pl.BlockSpec((CLUSTERS_PER_BATCH, NODE_OUT), lambda b: (b, 0)),
            pl.BlockSpec((EDGES_PER_BATCH, EDGE_OUT), lambda b: (b, 0)),
        ),
        compiler_params=pltpu.CompilerParams(
            dimension_semantics=("parallel",)),
        cost_estimate=pl.CostEstimate(
            flops=3_500_000, transcendentals=14_000, bytes_accessed=200_000),
    )

    @jax.jit
    def forward(point_cloud, slab):
        head_out, node_out, edge_out = call(point_cloud, slab)
        node_pred = node_out[:, :NODE_CLASSES]
        node_x = node_out[:, NODE_CLASSES:]
        edge_pred = edge_out[:, :EDGE_CLASSES]
        edge_attr = edge_out[:, EDGE_CLASSES:]
        coordinates = point_cloud[:, :3]
        batch_indices = point_cloud[:, 3].astype(jnp.int32)
        return {
            "spatial_embeddings": [head_out[:, :EMB]],
            "feature_embeddings": [head_out[:, EMB:EMB + FEAT]],
            "covariance": [head_out[:, EMB + FEAT:EMB + FEAT + COV]],
            "occupancy": [head_out[:, EMB + FEAT + COV:EMB + FEAT + COV + OCC]],
            "segmentation": [head_out[:, EMB + FEAT + COV + OCC:]],
            "coordinates": [coordinates],
            "batch_indices": [batch_indices],
            "node_pred": node_pred,
            "edge_pred": edge_pred,
            "graph": [{"x": node_x, "edge_index": edge_index,
                       "edge_attr": edge_attr}],
        }

    return forward


# ---------------------------------------------------------------------------
if __name__ == "__main__":
    key = jax.random.PRNGKey(0)
    k_pts, k_val, k_par = jax.random.split(key, 3)

    # point_cloud: [N, 5] = (x, y, z, batch_id, value)
    coords = jax.random.uniform(k_pts, (N_POINTS, 3), jnp.float32,
                                minval=0.0, maxval=SPATIAL_SIZE)
    batch_ids = jnp.repeat(jnp.arange(BATCH, dtype=jnp.float32), PTS_PER_BATCH)
    values = jax.random.uniform(k_val, (N_POINTS, 1), jnp.float32)
    point_cloud = jnp.concatenate([coords, batch_ids[:, None], values], axis=-1)

    params = init_params(k_par)
    consts, edge_index = build_constants()
    slab, offsets = pack_slab(params, consts)
    forward = build_forward(slab.shape, offsets, edge_index)

    out = forward(point_cloud, slab)
    jax.block_until_ready(out["node_pred"])
    jax.block_until_ready(out["edge_pred"])
    jax.block_until_ready(out["spatial_embeddings"][0])

    assert out["spatial_embeddings"][0].shape == (N_POINTS, EMB)
    assert out["segmentation"][0].shape == (N_POINTS, SEG)
    assert out["node_pred"].shape == (V_NODES, NODE_CLASSES)
    assert out["edge_pred"].shape == (E_EDGES, EDGE_CLASSES)
    assert out["graph"][0]["x"].shape == (V_NODES, NODE_DIM)
    assert out["graph"][0]["edge_attr"].shape == (E_EDGES, NODE_DIM)
    print("KERNEL_OK")
</pallas_src>

<mosaic_0001>
module attributes {stable_mosaic.version = 11 : i64} {
  func.func @fused_kernel(%arg0: i32, %arg1: memref<128x5xf32, #tpu.memory_space<vmem>>, %arg2: memref<352x128xbf16, #tpu.memory_space<vmem>>, %arg3: memref<128x27xf32, #tpu.memory_space<vmem>>, %arg4: memref<16x27xf32, #tpu.memory_space<vmem>>, %arg5: memref<240x24xf32, #tpu.memory_space<vmem>>) attributes {dimension_semantics = [#tpu.dimension_semantics<parallel>], iteration_bounds = array<i64: 2>, scalar_prefetch = 0 : i64, scratch_operands = 0 : i64, tpu.core_type = #tpu.core_type<tc>, window_params = [{transform_indices = @transform_0, window_bounds = array<i64: 128, 5>}, {pipeline_mode = #tpu.pipeline_mode<synchronous>, transform_indices = @transform_1, window_bounds = array<i64: 352, 128>}, {transform_indices = @transform_2, window_bounds = array<i64: 128, 27>}, {transform_indices = @transform_3, window_bounds = array<i64: 16, 27>}, {transform_indices = @transform_4, window_bounds = array<i64: 240, 24>}]} {
    %c0 = arith.constant 0 : index
    %c0_0 = arith.constant 0 : index
    %0 = vector.load %arg1[%c0, %c0_0] : memref<128x5xf32, #tpu.memory_space<vmem>>, vector<128x5xf32>
    %1 = arith.truncf %0 : vector<128x5xf32> to vector<128x5xbf16>
    %c288 = arith.constant 288 : index
    %c80 = arith.constant 80 : index
    %2 = vector.load %arg2[%c288, %c80] : memref<352x128xbf16, #tpu.memory_space<vmem>>, vector<5x32xbf16>
    %cst = arith.constant dense<0.000000e+00> : vector<128x32xf32>
    %3 = tpu.matmul %1, %2, %cst {dimension_numbers = #tpu.dot_dimension_numbers<[1], [0], [0], [1], [0, 0, 1, 1], [], []>} : vector<128x5xbf16>, vector<5x32xbf16>, vector<128x32xf32> -> vector<128x32xf32>
    %c320 = arith.constant 320 : index
    %c32 = arith.constant 32 : index
    %4 = vector.load %arg2[%c320, %c32] : memref<352x128xbf16, #tpu.memory_space<vmem>>, vector<1x32xbf16>
    %5 = arith.extf %4 : vector<1x32xbf16> to vector<1x32xf32>
    %6 = vector.broadcast %5 : vector<1x32xf32> to vector<128x32xf32>
    %7 = arith.addf %3, %6 : vector<128x32xf32>
    %cst_1 = arith.constant 0.000000e+00 : f32
    %8 = vector.broadcast %cst_1 : f32 to vector<128x32xf32>
    %9 = arith.maximumf %7, %8 : vector<128x32xf32>
    %10 = arith.truncf %9 : vector<128x32xf32> to vector<128x32xbf16>
    %c288_2 = arith.constant 288 : index
    %c0_3 = arith.constant 0 : index
    %11 = vector.load %arg2[%c288_2, %c0_3] : memref<352x128xbf16, #tpu.memory_space<vmem>>, vector<32x32xbf16>
    %cst_4 = arith.constant dense<0.000000e+00> : vector<128x32xf32>
    %12 = tpu.matmul %10, %11, %cst_4 {dimension_numbers = #tpu.dot_dimension_numbers<[1], [0], [0], [1], [0, 0, 1, 1], [], []>} : vector<128x32xbf16>, vector<32x32xbf16>, vector<128x32xf32> -> vector<128x32xf32>
    %c320_5 = arith.constant 320 : index
    %c64 = arith.constant 64 : index
    %13 = vector.load %arg2[%c320_5, %c64] : memref<352x128xbf16, #tpu.memory_space<vmem>>, vector<1x32xbf16>
    %14 = arith.extf %13 : vector<1x32xbf16> to vector<1x32xf32>
    %15 = vector.broadcast %14 : vector<1x32xf32> to vector<128x32xf32>
    %16 = arith.addf %12, %15 : vector<128x32xf32>
    %cst_6 = arith.constant 0.000000e+00 : f32
    %17 = vector.broadcast %cst_6 : f32 to vector<128x32xf32>
    %18 = arith.maximumf %16, %17 : vector<128x32xf32>
    %19 = arith.truncf %18 : vector<128x32xf32> to vector<128x32xbf16>
    %c288_7 = arith.constant 288 : index
    %c32_8 = arith.constant 32 : index
    %20 = vector.load %arg2[%c288_7, %c32_8] : memref<352x128xbf16, #tpu.memory_space<vmem>>, vector<32x27xbf16>
    %cst_9 = arith.constant dense<0.000000e+00> : vector<128x27xf32>
    %21 = tpu.matmul %19, %20, %cst_9 {dimension_numbers = #tpu.dot_dimension_numbers<[1], [0], [0], [1], [0, 0, 1, 1], [], []>} : vector<128x32xbf16>, vector<32x27xbf16>, vector<128x27xf32> -> vector<128x27xf32>
    %c320_10 = arith.constant 320 : index
    %c96 = arith.constant 96 : index
    %22 = vector.load %arg2[%c320_10, %c96] : memref<352x128xbf16, #tpu.memory_space<vmem>>, vector<1x27xbf16>
    %23 = arith.extf %22 : vector<1x27xbf16> to vector<1x27xf32>
    %24 = vector.broadcast %23 : vector<1x27xf32> to vector<128x27xf32>
    %25 = arith.addf %21, %24 : vector<128x27xf32>
    %c320_11 = arith.constant 320 : index
    %c0_12 = arith.constant 0 : index
    %26 = vector.load %arg2[%c320_11, %c0_12] : memref<352x128xbf16, #tpu.memory_space<vmem>>, vector<5x27xbf16>
    %cst_13 = arith.constant dense<0.000000e+00> : vector<128x27xf32>
    %27 = tpu.matmul %1, %26, %cst_13 {dimension_numbers = #tpu.dot_dimension_numbers<[1], [0], [0], [1], [0, 0, 1, 1], [], []>} : vector<128x5xbf16>, vector<5x27xbf16>, vector<128x27xf32> -> vector<128x27xf32>
    %28 = tpu.iota {dimensions = array<i32: 1>} : vector<128x27xi32>
    %c3_i32 = arith.constant 3 : i32
    %29 = vector.broadcast %c3_i32 : i32 to vector<128x27xi32>
    %30 = arith.cmpi slt, %28, %29 : vector<128x27xi32>
    %c19_i32 = arith.constant 19 : i32
    %31 = vector.broadcast %c19_i32 : i32 to vector<128x27xi32>
    %32 = arith.cmpi sge, %28, %31 : vector<128x27xi32>
    %c21_i32 = arith.constant 21 : i32
    %33 = vector.broadcast %c21_i32 : i32 to vector<128x27xi32>
    %34 = arith.cmpi slt, %28, %33 : vector<128x27xi32>
    %35 = arith.andi %32, %34 : vector<128x27xi1>
    %36 = math.tanh %25 : vector<128x27xf32>
    %37 = arith.addf %36, %27 : vector<128x27xf32>
    %38 = arith.negf %25 : vector<128x27xf32>
    %39 = math.exp %38 : vector<128x27xf32>
    %cst_14 = arith.constant 1.000000e+00 : f32
    %40 = vector.broadcast %cst_14 : f32 to vector<128x27xf32>
    %41 = arith.addf %40, %39 : vector<128x27xf32>
    %42 = arith.divf %40, %41 : vector<128x27xf32>
    %cst_15 = arith.constant 2.000000e+00 : f32
    %43 = vector.broadcast %cst_15 : f32 to vector<128x27xf32>
    %44 = arith.mulf %43, %42 : vector<128x27xf32>
    %45 = arith.select %35, %44, %25 : vector<128x27xi1>, vector<128x27xf32>
    %46 = arith.select %30, %37, %45 : vector<128x27xi1>, vector<128x27xf32>
    %c0_16 = arith.constant 0 : index
    %c0_17 = arith.constant 0 : index
    %47 = vector.load %arg3[%c0_16, %c0_17] : memref<128x27xf32, #tpu.memory_space<vmem>>, vector<128x27xf32>
    tpu.vector_store %arg3[%c0_16, %c0_17], %46 {strides = array<i32>} : memref<128x27xf32, #tpu.memory_space<vmem>>, vector<128x27xf32>,
    %48 = vector.extract_strided_slice %46 {offsets = [0, 0], sizes = [128, 22], strides = [1, 1]} : vector<128x27xf32> to vector<128x22xf32>
    %49 = arith.truncf %48 : vector<128x22xf32> to vector<128x22xbf16>
    %c272 = arith.constant 272 : index
    %c0_18 = arith.constant 0 : index
    %50 = vector.load %arg2[%c272, %c0_18] : memref<352x128xbf16, #tpu.memory_space<vmem>>, vector<16x128xbf16>
    %cst_19 = arith.constant dense<0.000000e+00> : vector<16x22xf32>
    %51 = tpu.matmul %50, %49, %cst_19 {dimension_numbers = #tpu.dot_dimension_numbers<[1], [0], [0], [1], [0, 0, 1, 1], [], []>} : vector<16x128xbf16>, vector<128x22xbf16>, vector<16x22xf32> -> vector<16x22xf32>
    %52 = arith.truncf %51 : vector<16x22xf32> to vector<16x22xbf16>
    %c0_20 = arith.constant 0 : index
    %c64_21 = arith.constant 64 : index
    %53 = vector.load %arg2[%c0_20, %c64_21] : memref<352x128xbf16, #tpu.memory_space<vmem>>, vector<22x64xbf16>
    %cst_22 = arith.constant dense<0.000000e+00> : vector<16x64xf32>
    %54 = tpu.matmul %52, %53, %cst_22 {dimension_numbers = #tpu.dot_dimension_numbers<[1], [0], [0], [1], [0, 0, 1, 1], [], []>} : vector<16x22xbf16>, vector<22x64xbf16>, vector<16x64xf32> -> vector<16x64xf32>
    %55 = arith.truncf %54 : vector<16x64xf32> to vector<16x64xbf16>
    %56 = vector.extract_strided_slice %55 {offsets = [0, 0], sizes = [16, 32], strides = [1, 1]} : vector<16x64xbf16> to vector<16x32xbf16>
    %57 = tpu.concatenate %56, %52 in 1 : vector<16x32xbf16>, vector<16x22xbf16> -> vector<16x54xbf16>
    %58 = vector.extract_strided_slice %55 {offsets = [0, 32], sizes = [16, 32], strides = [1, 1]} : vector<16x64xbf16> to vector<16x32xbf16>
    %cst_23 = arith.constant 0.000000e+00 : bf16
    %59 = vector.broadcast %cst_23 : bf16 to vector<16x22xbf16>
    %60 = arith.subf %59, %52 : vector<16x22xbf16>
    %61 = tpu.concatenate %58, %60 in 1 : vector<16x32xbf16>, vector<16x22xbf16> -> vector<16x54xbf16>
    %62 = tpu.concatenate %57, %61 in 0 : vector<16x54xbf16>, vector<16x54xbf16> -> vector<32x54xbf16>
    %c0_24 = arith.constant 0 : index
    %c0_25 = arith.constant 0 : index
    %63 = vector.load %arg2[%c0_24, %c0_25] : memref<352x128xbf16, #tpu.memory_space<vmem>>, vector<240x32xbf16>
    %cst_26 = arith.constant dense<0.000000e+00> : vector<240x54xf32>
    %64 = tpu.matmul %63, %62, %cst_26 {dimension_numbers = #tpu.dot_dimension_numbers<[1], [0], [0], [1], [0, 0, 1, 1], [], []>} : vector<240x32xbf16>, vector<32x54xbf16>, vector<240x54xf32> -> vector<240x54xf32>
    %65 = vector.extract_strided_slice %64 {offsets = [0, 0], sizes = [240, 32], strides = [1, 1]} : vector<240x54xf32> to vector<240x32xf32>
    %c336 = arith.constant 336 : index
    %c0_27 = arith.constant 0 : index
    %66 = vector.load %arg2[%c336, %c0_27] : memref<352x128xbf16, #tpu.memory_space<vmem>>, vector<1x32xbf16>
    %67 = arith.extf %66 : vector<1x32xbf16> to vector<1x32xf32>
    %68 = vector.broadcast %67 : vector<1x32xf32> to vector<240x32xf32>
    %69 = arith.addf %65, %68 : vector<240x32xf32>
    %cst_28 = arith.constant 0.000000e+00 : f32
    %70 = vector.broadcast %cst_28 : f32 to vector<240x32xf32>
    %71 = arith.maximumf %69, %70 : vector<240x32xf32>
    %72 = vector.extract_strided_slice %64 {offsets = [0, 32], sizes = [240, 22], strides = [1, 1]} : vector<240x54xf32> to vector<240x22xf32>
    %73 = arith.truncf %71 : vector<240x32xf32> to vector<240x32xbf16>
    %c288_29 = arith.constant 288 : index
    %c64_30 = arith.constant 64 : index
    %74 = vector.load %arg2[%c288_29, %c64_30] : memref<352x128xbf16, #tpu.memory_space<vmem>>, vector<32x2xbf16>
    %cst_31 = arith.constant dense<0.000000e+00> : vector<240x2xf32>
    %75 = tpu.matmul %73, %74, %cst_31 {dimension_numbers = #tpu.dot_dimension_numbers<[1], [0], [0], [1], [0, 0, 1, 1], [], []>} : vector<240x32xbf16>, vector<32x2xbf16>, vector<240x2xf32> -> vector<240x2xf32>
    %c256 = arith.constant 256 : index
    %c112 = arith.constant 112 : index
    %76 = vector.load %arg2[%c256, %c112] : memref<352x128xbf16, #tpu.memory_space<vmem>>, vector<1x2xbf16>
    %77 = arith.extf %76 : vector<1x2xbf16> to vector<1x2xf32>
    %78 = vector.broadcast %77 : vector<1x2xf32> to vector<240x2xf32>
    %79 = arith.addf %75, %78 : vector<240x2xf32>
    %80 = tpu.concatenate %79, %72 in 1 : vector<240x2xf32>, vector<240x22xf32> -> vector<240x24xf32>
    %c0_32 = arith.constant 0 : index
    %c0_33 = arith.constant 0 : index
    %81 = vector.load %arg5[%c0_32, %c0_33] : memref<240x24xf32, #tpu.memory_space<vmem>>, vector<240x24xf32>
    tpu.vector_store %arg5[%c0_32, %c0_33], %80 {strides = array<i32>} : memref<240x24xf32, #tpu.memory_space<vmem>>, vector<240x24xf32>,
    %c240 = arith.constant 240 : index
    %c0_34 = arith.constant 0 : index
    %82 = vector.load %arg2[%c240, %c0_34] : memref<352x128xbf16, #tpu.memory_space<vmem>>, vector<16x128xbf16>
    %83 = vector.extract_strided_slice %73 {offsets = [0, 0], sizes = [128, 32], strides = [1, 1]} : vector<240x32xbf16> to vector<128x32xbf16>
    %cst_35 = arith.constant dense<0.000000e+00> : vector<16x32xf32>
    %84 = tpu.matmul %82, %83, %cst_35 {dimension_numbers = #tpu.dot_dimension_numbers<[1], [0], [0], [1], [0, 0, 1, 1], [], []>} : vector<16x128xbf16>, vector<128x32xbf16>, vector<16x32xf32> -> vector<16x32xf32>
    %c256_36 = arith.constant 256 : index
    %c0_37 = arith.constant 0 : index
    %85 = vector.load %arg2[%c256_36, %c0_37] : memref<352x128xbf16, #tpu.memory_space<vmem>>, vector<16x112xbf16>
    %86 = vector.extract_strided_slice %73 {offsets = [128, 0], sizes = [112, 32], strides = [1, 1]} : vector<240x32xbf16> to vector<112x32xbf16>
    %cst_38 = arith.constant dense<0.000000e+00> : vector<16x32xf32>
    %87 = tpu.matmul %85, %86, %cst_38 {dimension_numbers = #tpu.dot_dimension_numbers<[1], [0], [0], [1], [0, 0, 1, 1], [], []>} : vector<16x112xbf16>, vector<112x32xbf16>, vector<16x32xf32> -> vector<16x32xf32>
    %88 = arith.addf %84, %87 : vector<16x32xf32>
    %89 = arith.truncf %88 : vector<16x32xf32> to vector<16x32xbf16>
    %90 = tpu.concatenate %52, %89 in 1 : vector<16x22xbf16>, vector<16x32xbf16> -> vector<16x54xbf16>
    %c0_39 = arith.constant 0 : index
    %c32_40 = arith.constant 32 : index
    %91 = vector.load %arg2[%c0_39, %c32_40] : memref<352x128xbf16, #tpu.memory_space<vmem>>, vector<54x32xbf16>
    %cst_41 = arith.constant dense<0.000000e+00> : vector<16x32xf32>
    %92 = tpu.matmul %90, %91, %cst_41 {dimension_numbers = #tpu.dot_dimension_numbers<[1], [0], [0], [1], [0, 0, 1, 1], [], []>} : vector<16x54xbf16>, vector<54x32xbf16>, vector<16x32xf32> -> vector<16x32xf32>
    %c336_42 = arith.constant 336 : index
    %c32_43 = arith.constant 32 : index
    %93 = vector.load %arg2[%c336_42, %c32_43] : memref<352x128xbf16, #tpu.memory_space<vmem>>, vector<1x32xbf16>
    %94 = arith.extf %93 : vector<1x32xbf16> to vector<1x32xf32>
    %95 = vector.broadcast %94 : vector<1x32xf32> to vector<16x32xf32>
    %96 = arith.addf %92, %95 : vector<16x32xf32>
    %cst_44 = arith.constant 0.000000e+00 : f32
    %97 = vector.broadcast %cst_44 : f32 to vector<16x32xf32>
    %98 = arith.maximumf %96, %97 : vector<16x32xf32>
    %99 = arith.truncf %98 : vector<16x32xf32> to vector<16x32xbf16>
    %c288_45 = arith.constant 288 : index
    %c72 = arith.constant 72 : index
    %100 = vector.load %arg2[%c288_45, %c72] : memref<352x128xbf16, #tpu.memory_space<vmem>>, vector<32x5xbf16>
    %cst_46 = arith.constant dense<0.000000e+00> : vector<16x5xf32>
    %101 = tpu.matmul %99, %100, %cst_46 {dimension_numbers = #tpu.dot_dimension_numbers<[1], [0], [0], [1], [0, 0, 1, 1], [], []>} : vector<16x32xbf16>, vector<32x5xbf16>, vector<16x5xf32> -> vector<16x5xf32>
    %c256_47 = arith.constant 256 : index
    %c120 = arith.constant 120 : index
    %102 = vector.load %arg2[%c256_47, %c120] : memref<352x128xbf16, #tpu.memory_space<vmem>>, vector<1x5xbf16>
    %103 = arith.extf %102 : vector<1x5xbf16> to vector<1x5xf32>
    %104 = vector.broadcast %103 : vector<1x5xf32> to vector<16x5xf32>
    %105 = arith.addf %101, %104 : vector<16x5xf32>
    %106 = tpu.concatenate %105, %51 in 1 : vector<16x5xf32>, vector<16x22xf32> -> vector<16x27xf32>
    %c0_48 = arith.constant 0 : index
    %c0_49 = arith.constant 0 : index
    %107 = vector.load %arg4[%c0_48, %c0_49] : memref<16x27xf32, #tpu.memory_space<vmem>>, vector<16x27xf32>
    tpu.vector_store %arg4[%c0_48, %c0_49], %106 {strides = array<i32>} : memref<16x27xf32, #tpu.memory_space<vmem>>, vector<16x27xf32>,
    return
  }
  func.func @transform_0(%arg0: i32) -> (i32, i32) {
    %c0_i32 = arith.constant 0 : i32
    %c0_i32_0 = arith.constant 0 : i32
    return %arg0, %c0_i32 : i32, i32
  }
  func.func @transform_1(%arg0: i32) -> (i32, i32) {
    %c0_i32 = arith.constant 0 : i32
    %c0_i32_0 = arith.constant 0 : i32
    %c0_i32_1 = arith.constant 0 : i32
    return %c0_i32, %c0_i32_0 : i32, i32
  }
  func.func @transform_2(%arg0: i32) -> (i32, i32) {
    %c0_i32 = arith.constant 0 : i32
    %c0_i32_0 = arith.constant 0 : i32
    return %arg0, %c0_i32 : i32, i32
  }
  func.func @transform_3(%arg0: i32) -> (i32, i32) {
    %c0_i32 = arith.constant 0 : i32
    %c0_i32_0 = arith.constant 0 : i32
    return %arg0, %c0_i32 : i32, i32
  }
  func.func @transform_4(%arg0: i32) -> (i32, i32) {
    %c0_i32 = arith.constant 0 : i32
    %c0_i32_0 = arith.constant 0 : i32
    return %arg0, %c0_i32 : i32, i32
  }
}

</mosaic_0001>

<llo_original>
// kernel: forward.1
$region0: #{forward.1}
  #allocation0 [shape = 'u32[]', space=smem, size = 0x4, offset = 0x4, fixed_abs, tag = 'smem constant byte address 0x4 - core index']
  #allocation1 [shape = 'u32[144,128]{1,0:T(1,128)}', space=vmem, size = 0x12000, scoped, tag = 'internal scratch']
  %s0 = inlined_call_operand.vmem [shape: f32[256,5], index: 0, kind: input, shape index: {}]
  %s1 = inlined_call_operand.vmem [shape: bf16[352,128], index: 1, kind: input, shape index: {}]
  %s2 = inlined_call_operand.vmem [shape: f32[256,27], index: 2, kind: output, shape index: {0}]
  %s3 = inlined_call_operand.vmem [shape: f32[32,27], index: 3, kind: output, shape index: {1}]
  %s4 = inlined_call_operand.vmem [shape: f32[480,24], index: 4, kind: output, shape index: {2}]
  %5 = xla_tuple %s2, %s3, %s4
  %s6 = sld [smem:[#allocation0]]
  $region57: #{forward.1} parent=0
    _
  %s8 = ssub.s32 1, %s6
  %s9 = scalar_select 0, %s8, %s6
  loop: start=0, step=1, limit=4
  $region2: #{forward.1} parent=0 // loop_pre_header
    _
  $region3: #{forward.1} parent=0 // loop_header
    %s11 = sphi 0, %s15
    %p12 = scmp.ge.s32.totalorder %s11, 4
    %s21 = sphi 0, %s23
    %s24 = sphi 0, %s21
    %s25 = sphi 0, %s24
    %s41 = sphi 0, %s25
    %s45 = sphi 0, %s45
    %s47 = sphi 0, %s45
    %s48 = sphi 0, %s47
    %s62 = sphi 0, %s48
    %s68 = sphi 0, %s70
    %s71 = sphi 0, %s68
    %s72 = sphi 0, %s71
    %s88 = sphi 0, %s72
    %s94 = sphi 0, %s96
    %s97 = sphi 0, %s94
    %s98 = sphi 0, %s97
    %s114 = sphi 0, %s98
    %s120 = sphi 0, %s122
    %s123 = sphi 0, %s120
    %s124 = sphi 0, %s123
    %s140 = sphi 0, %s124
  $region4: #{forward.1} parent=0 // loop_header_branch
    %14 = sbr.rel (%p12) target = $region8
  $region5: #{forward.1} parent=0 // loop_body
    %s16 = ssub.s32 %s11, 1
    %s17 = ssub.s32 %s11, 2
    %s18 = sadd.s32 %s11, 1
    %s19 = ssub.s32 %s11, %s18
    %p20 = scmp.eq.s32.totalorder %s19, 0
    %s22 = sadd.s32 %s21, 1
    %s23 = scalar_select %p20, %s21, %s22
    %p26 = pneg %p20
    %p27 = scmp.eq.s32.totalorder %s11, 1
    %p28 = por %p26, %p27
    %p29 = scmp.ne.s32.totalorder %s21, %s24
    %p30 = scmp.eq.s32.totalorder %s11, 0
    %p31 = por %p29, %p30
    %p32 = scmp.ne.s32.totalorder %s21, %s24
    %p33 = scmp.eq.s32.totalorder %s16, 1
    %p34 = por %p32, %p33
    %p35 = scmp.ne.s32.totalorder %s24, %s25
    %p36 = scmp.eq.s32.totalorder %s16, 0
    %p37 = por %p35, %p36
    %p38 = scmp.ne.s32.totalorder %s24, %s25
    %p39 = scmp.eq.s32.totalorder %s17, 1
    %p40 = por %p38, %p39
    %p42 = scmp.ne.s32.totalorder %s25, %s41
    %p43 = scmp.eq.s32.totalorder %s17, 0
    %p44 = por %p42, %p43
    %s46 = sadd.s32 %s45, 1
    %p49 = scmp.eq.s32.totalorder %s11, 1
    %p50 = scmp.ne.s32.totalorder %s45, %s47
    %p51 = scmp.eq.s32.totalorder %s11, 0
    %p52 = por %p50, %p51
    %p53 = scmp.ne.s32.totalorder %s45, %s47
    %p54 = scmp.eq.s32.totalorder %s16, 1
    %p55 = por %p53, %p54
    %p56 = scmp.ne.s32.totalorder %s47, %s48
    %p57 = scmp.eq.s32.totalorder %s16, 0
    %p58 = por %p56, %p57
    %p59 = scmp.ne.s32.totalorder %s47, %s48
    %p60 = scmp.eq.s32.totalorder %s17, 1
    %p61 = por %p59, %p60
    %p63 = scmp.ne.s32.totalorder %s48, %s62
    %p64 = scmp.eq.s32.totalorder %s17, 0
    %p65 = por %p63, %p64
    %s66 = ssub.s32 %s11, %s18
    %p67 = scmp.eq.s32.totalorder %s66, 0
    %s69 = sadd.s32 %s68, 1
    %s70 = scalar_select %p67, %s68, %s69
    %p73 = pneg %p67
    %p74 = scmp.eq.s32.totalorder %s11, 1
    %p75 = por %p73, %p74
    %p76 = scmp.ne.s32.totalorder %s68, %s71
    %p77 = scmp.eq.s32.totalorder %s11, 0
    %p78 = por %p76, %p77
    %p79 = scmp.ne.s32.totalorder %s68, %s71
    %p80 = scmp.eq.s32.totalorder %s16, 1
    %p81 = por %p79, %p80
    %p82 = scmp.ne.s32.totalorder %s71, %s72
    %p83 = scmp.eq.s32.totalorder %s16, 0
    %p84 = por %p82, %p83
    %p85 = scmp.ne.s32.totalorder %s71, %s72
    %p86 = scmp.eq.s32.totalorder %s17, 1
    %p87 = por %p85, %p86
    %p89 = scmp.ne.s32.totalorder %s72, %s88
    %p90 = scmp.eq.s32.totalorder %s17, 0
    %p91 = por %p89, %p90
    %s92 = ssub.s32 %s11, %s18
    %p93 = scmp.eq.s32.totalorder %s92, 0
    %s95 = sadd.s32 %s94, 1
    %s96 = scalar_select %p93, %s94, %s95
    %p99 = pneg %p93
    %p100 = scmp.eq.s32.totalorder %s11, 1
    %p101 = por %p99, %p100
    %p102 = scmp.ne.s32.totalorder %s94, %s97
    %p103 = scmp.eq.s32.totalorder %s11, 0
    %p104 = por %p102, %p103
    %p105 = scmp.ne.s32.totalorder %s94, %s97
    %p106 = scmp.eq.s32.totalorder %s16, 1
    %p107 = por %p105, %p106
    %p108 = scmp.ne.s32.totalorder %s97, %s98
    %p109 = scmp.eq.s32.totalorder %s16, 0
    %p110 = por %p108, %p109
    %p111 = scmp.ne.s32.totalorder %s97, %s98
    %p112 = scmp.eq.s32.totalorder %s17, 1
    %p113 = por %p111, %p112
    %p115 = scmp.ne.s32.totalorder %s98, %s114
    %p116 = scmp.eq.s32.totalorder %s17, 0
    %p117 = por %p115, %p116
    %s118 = ssub.s32 %s11, %s18
    %p119 = scmp.eq.s32.totalorder %s118, 0
    %s121 = sadd.s32 %s120, 1
    %s122 = scalar_select %p119, %s120, %s121
    %p125 = pneg %p119
    %p126 = scmp.eq.s32.totalorder %s11, 1
    %p127 = por %p125, %p126
    %p128 = scmp.ne.s32.totalorder %s120, %s123
    %p129 = scmp.eq.s32.totalorder %s11, 0
    %p130 = por %p128, %p129
    %p131 = scmp.ne.s32.totalorder %s120, %s123
    %p132 = scmp.eq.s32.totalorder %s16, 1
    %p133 = por %p131, %p132
    %p134 = scmp.ne.s32.totalorder %s123, %s124
    %p135 = scmp.eq.s32.totalorder %s16, 0
    %p136 = por %p134, %p135
    %p137 = scmp.ne.s32.totalorder %s123, %s124
    %p138 = scmp.eq.s32.totalorder %s17, 1
    %p139 = por %p137, %p138
    %p141 = scmp.ne.s32.totalorder %s124, %s140
    %p142 = scmp.eq.s32.totalorder %s17, 0
    %p143 = por %p141, %p142
    %p144 = scmp.le.s32.totalorder 1, %s11
    %p145 = scmp.lt.s32.totalorder %s11, 3
    %p146 = pnand %p144, %p145
    %p147 = pneg %p146
    // Predicated region
    $region9: #{forward.1} parent=5 // pred_check
      _
    $region10: #{forward.1} parent=5 // pred_check_branch
      %149 = sbr.rel (%p146) target = $region12
    $region11: #{forward.1} parent=5 // pred_region
      %s150 = ssub.s32 %s11, 1
      // Predicated region
      $region13: #{forward.1} parent=11 // pred_check
        %p151 = pneg %p58
      $region14: #{forward.1} parent=11 // pred_check_branch
        %153 = sbr.rel (%p151) target = $region16
      $region15: #{forward.1} parent=11 // pred_region
        _
      $region16: #{forward.1} parent=11 // pred_fallthru
        _
    $region12: #{forward.1} parent=5 // pred_fallthru
      _
    %p154 = scmp.lt.s32.totalorder %s11, 2
    // Predicated region
    $region17: #{forward.1} parent=5 // pred_check
      %p155 = pneg %p154
    $region18: #{forward.1} parent=5 // pred_check_branch
      %157 = sbr.rel (%p155) target = $region20
    $region19: #{forward.1} parent=5 // pred_region
      // Predicated region
      $region21: #{forward.1} parent=19 // pred_check
        %p158 = pneg %p31
      $region22: #{forward.1} parent=19 // pred_check_branch
        %160 = sbr.rel (%p158) target = $region24
      $region23: #{forward.1} parent=19 // pred_region
        %s161 = smul.u32 16, %s11
        %p162 = scmp.lt.s32.totalorder %s161, 31
        %s163 = scalar_select %p162, %s161, 31
        %s164 = smul.addr %s163, 8
        %s165 = scalar_lea.vmem %s0, %s164
        %s166 = smul.u32 16, %s11
      $region24: #{forward.1} parent=19 // pred_fallthru
        _
    $region20: #{forward.1} parent=5 // pred_fallthru
      _
    %p167 = scmp.le.s32.totalorder 1, %s11
    %p168 = scmp.lt.s32.totalorder %s11, 3
    %p169 = pnand %p167, %p168
    %p170 = pneg %p169
    // Predicated region
    $region25: #{forward.1} parent=5 // pred_check
      _
    $region26: #{forward.1} parent=5 // pred_check_branch
      %172 = sbr.rel (%p169) target = $region28
    $region27: #{forward.1} parent=5 // pred_region
      %s173 = ssub.s32 %s11, 1
      %s174 = smul.u32 16, %s16
      %p175 = scmp.lt.s32.totalorder %s174, 31
      %s176 = scalar_select %p175, %s174, 31
      %s177 = smul.addr %s176, 8
      %s178 = scalar_lea.vmem %s0, %s177
      %p179 = pneg %p37
      %p180 = pneg %p34
      %p181 = pneg %p58
      %p182 = pneg %p55
      %p183 = pneg %p84
      %p184 = pneg %p81
      %s185 = smul.u32 16, %s16
      %p186 = scmp.lt.s32.totalorder %s185, 31
      %s187 = scalar_select %p186, %s185, 31
      %s188 = smul.addr %s187, 8
      %s189 = scalar_lea.vmem %s2, %s188
      %p190 = pneg %p110
      %p191 = pneg %p107
      %s192 = smul.u32 2, %s16
      %p193 = scmp.lt.s32.totalorder %s192, 3
      %s194 = scalar_select %p193, %s192, 3
      %s195 = smul.addr %s194, 8
      %s196 = scalar_lea.vmem %s3, %s195
      %p197 = pneg %p136
      %p198 = pneg %p133
      %s199 = smul.u32 30, %s16
      %p200 = scmp.lt.s32.totalorder %s199, 59
      %s201 = scalar_select %p200, %s199, 59
      %s202 = smul.addr %s201, 8
      %s203 = scalar_lea.vmem %s4, %s202
      %s204 = smul.u32 16, %s16
      %p205 = scmp.lt.s32.totalorder %s204, 31
      %s206 = scalar_select %p205, %s204, 31
      %s207 = smul.addr %s206, 8
      %s208 = scalar_lea.vmem %s0, %s207
      %s209 = smul.u32 16, %s16
      %s210 = smul.u32 16, %s16
      %p211 = scmp.lt.s32.totalorder %s210, 31
      %s212 = scalar_select %p211, %s210, 31
      %s213 = smul.addr %s212, 8
      %s214 = scalar_lea.vmem %s2, %s213
      %s215 = smul.u32 16, %s16
      %s216 = smul.u32 2, %s16
      %p217 = scmp.lt.s32.totalorder %s216, 3
      %s218 = scalar_select %p217, %s216, 3
      %s219 = smul.addr %s218, 8
      %s220 = scalar_lea.vmem %s3, %s219
      %s221 = smul.u32 2, %s16
      %s222 = smul.u32 30, %s16
      %p223 = scmp.lt.s32.totalorder %s222, 59
      %s224 = scalar_select %p223, %s222, 59
      %s225 = smul.addr %s224, 8
      %s226 = scalar_lea.vmem %s4, %s225
      %s227 = smul.u32 30, %s16
      %v229 = vld [vmem:[%s208] sm:$0xff]
      %v230 = vld [vmem:[%s208 + $0x8] sm:$0xff]
      %v231 = vld [vmem:[%s208 + $0x10] sm:$0xff]
      %v232 = vld [vmem:[%s208 + $0x18] sm:$0xff]
      %v233 = vld [vmem:[%s208 + $0x20] sm:$0xff]
      %v234 = vld [vmem:[%s208 + $0x28] sm:$0xff]
      %v235 = vld [vmem:[%s208 + $0x30] sm:$0xff]
      %v236 = vld [vmem:[%s208 + $0x38] sm:$0xff]
      %v237 = vld [vmem:[%s208 + $0x40] sm:$0xff]
      %v238 = vld [vmem:[%s208 + $0x48] sm:$0xff]
      %v239 = vld [vmem:[%s208 + $0x50] sm:$0xff]
      %v240 = vld [vmem:[%s208 + $0x58] sm:$0xff]
      %v241 = vld [vmem:[%s208 + $0x60] sm:$0xff]
      %v242 = vld [vmem:[%s208 + $0x68] sm:$0xff]
      %v243 = vld [vmem:[%s208 + $0x70] sm:$0xff]
      %v244 = vld [vmem:[%s208 + $0x78] sm:$0xff]
      %v245 = vpack.c.bf16 %v230, %v229
      %v246 = vpack.c.bf16 %v232, %v231
      %v247 = vpack.c.bf16 %v234, %v233
      %v248 = vpack.c.bf16 %v236, %v235
      %v249 = vpack.c.bf16 %v238, %v237
      %v250 = vpack.c.bf16 %v240, %v239
      %v251 = vpack.c.bf16 %v242, %v241
      %v252 = vpack.c.bf16 %v244, %v243
      %v253 = vld [vmem:[%s1 + $0x90] sm:$0x7]
      %v254 = vld [vmem:[%s1 + $0xa0] sm:$0x1]
      %v255 = vunpack.c.l.bf16 %v254
      %v256 = vlaneseq
      %v257 = vshrl.u32 %v256, 7
      %v258 = vsub.s32 0, %v257
      %v259 = vrot.slane %v255, %v258
      %v261 = vunpack.c.l.b16 %v253
      %v262 = vpack.c.b16 %v261, %v261
      %263 = vrot.lane.b32.xlu0 %v262, 48
      %v264 = vpop.permute.xlu0 %263
      %266 = vrot.lane.b32.xlu0 %v259, 96
      %v267 = vpop.permute.xlu0 %266
      %vm269 = vcmask 39936
      %v271 = vsel %vm269, %v245, 0
      %v274 = vsel %vm269, %v246, 0
      %v277 = vsel %vm269, %v247, 0
      %v280 = vsel %vm269, %v248, 0
      %v283 = vsel %vm269, %v249, 0
      %v286 = vsel %vm269, %v250, 0
      %v289 = vsel %vm269, %v251, 0
      %v292 = vsel %vm269, %v252, 0
      %vm294 = vcmask 1041408
      %vm295 = vcmask 1042432
      %v296 = vsel %vm294, 4294967295, 65535
      %v297 = vsel %vm295, %v296, 0
      %v299 = vand.u32 %v264, %v297
      %301 = vmatprep.subr.bf16.mxu0 0
      %302 = vmatpush1.bf16.msra.mxu0 %v299
      %303 = vmatprep.subr.bf16.mxu0 0
      %304 = vmatpush1.bf16.msra.mxu0 0
      %305 = vmatprep.subr.bf16.mxu0 0
      %306 = vmatpush1.bf16.msra.mxu0 0
      %307 = vmatprep.subr.bf16.mxu0 0
      %308 = vmatpush1.bf16.msra.mxu0 0
      %309 = vmatprep.subr.bf16.mxu0 0
      %310 = vmatpush1.bf16.msra.mxu0 0
      %311 = vmatprep.subr.bf16.mxu0 0
      %312 = vmatpush1.bf16.msra.mxu0 0
      %313 = vmatprep.subr.bf16.mxu0 0
      %314 = vmatpush1.bf16.msra.mxu0 0
      %315 = vmatprep.subr.bf16.mxu0 0
      %316 = vmatpush1.bf16.msra.mxu0 0
      %317 = vmatprep.subr.bf16.mxu0 0
      %318 = vmatpush1.bf16.msra.mxu0 0
      %319 = vmatprep.subr.bf16.mxu0 0
      %320 = vmatpush1.bf16.msra.mxu0 0
      %321 = vmatprep.subr.bf16.mxu0 0
      %322 = vmatpush1.bf16.msra.mxu0 0
      %323 = vmatprep.subr.bf16.mxu0 0
      %324 = vmatpush1.bf16.msra.mxu0 0
      %325 = vmatprep.subr.bf16.mxu0 0
      %326 = vmatpush1.bf16.msra.mxu0 0
      %327 = vmatprep.subr.bf16.mxu0 0
      %328 = vmatpush1.bf16.msra.mxu0 0
      %329 = vmatprep.subr.bf16.mxu0 0
      %330 = vmatpush1.bf16.msra.mxu0 0
      %331 = vmatprep.subr.bf16.mxu0 0
      %332 = vmatpush1.bf16.msra.mxu0 0
      %333 = vmatprep.mubr.bf16.mxu0 0
      %334 = vmatmul.mubr.bf16.gmra.mrb[0].mxu0 %v271
      %v335 = vpop.f32.mrb[0].mxu0
      %v336 = vadd.f32 %v267, %v335
      %v337 = vpop.f32.mrb[0].mxu0
      %v338 = vpop.f32.mrb[0].mxu0
      %v339 = vadd.f32 %v267, %v338
      %v340 = vpop.f32.mrb[0].mxu0
      %341 = vmatprep.mubr.bf16.mxu0 0
      %342 = vmatmul.mubr.bf16.gmra.mrb[0].mxu0 %v274
      %v343 = vpop.f32.mrb[0].mxu0
      %v344 = vadd.f32 %v267, %v343
      %v345 = vpop.f32.mrb[0].mxu0
      %v346 = vpop.f32.mrb[0].mxu0
      %v347 = vadd.f32 %v267, %v346
      %v348 = vpop.f32.mrb[0].mxu0
      %349 = vmatprep.mubr.bf16.mxu0 0
      %350 = vmatmul.mubr.bf16.gmra.mrb[0].mxu0 %v277
      %v351 = vpop.f32.mrb[0].mxu0
      %v352 = vadd.f32 %v267, %v351
      %v353 = vpop.f32.mrb[0].mxu0
      %v354 = vpop.f32.mrb[0].mxu0
      %v355 = vadd.f32 %v267, %v354
      %v356 = vpop.f32.mrb[0].mxu0
      %357 = vmatprep.mubr.bf16.mxu0 0
      %358 = vmatmul.mubr.bf16.gmra.mrb[0].mxu0 %v280
      %v359 = vpop.f32.mrb[0].mxu0
      %v360 = vadd.f32 %v267, %v359
      %v361 = vpop.f32.mrb[0].mxu0
      %v362 = vpop.f32.mrb[0].mxu0
      %v363 = vadd.f32 %v267, %v362
      %v364 = vpop.f32.mrb[0].mxu0
      %365 = vmatprep.mubr.bf16.mxu0 0
      %366 = vmatmul.mubr.bf16.gmra.mrb[0].mxu0 %v283
      %v367 = vpop.f32.mrb[0].mxu0
      %v368 = vadd.f32 %v267, %v367
      %v369 = vpop.f32.mrb[0].mxu0
      %v370 = vpop.f32.mrb[0].mxu0
      %v371 = vadd.f32 %v267, %v370
      %v372 = vpop.f32.mrb[0].mxu0
      %373 = vmatprep.mubr.bf16.mxu0 0
      %374 = vmatmul.mubr.bf16.gmra.mrb[0].mxu0 %v286
      %v375 = vpop.f32.mrb[0].mxu0
      %v376 = vadd.f32 %v267, %v375
      %v377 = vpop.f32.mrb[0].mxu0
      %v378 = vpop.f32.mrb[0].mxu0
      %v379 = vadd.f32 %v267, %v378
      %v380 = vpop.f32.mrb[0].mxu0
      %381 = vmatprep.mubr.bf16.mxu0 0
      %382 = vmatmul.mubr.bf16.gmra.mrb[0].mxu0 %v289
      %v383 = vpop.f32.mrb[0].mxu0
      %v384 = vadd.f32 %v267, %v383
      %v385 = vpop.f32.mrb[0].mxu0
      %v386 = vpop.f32.mrb[0].mxu0
      %v387 = vadd.f32 %v267, %v386
      %v388 = vpop.f32.mrb[0].mxu0
      %389 = vmatprep.mubr.bf16.mxu0 0
      %390 = vmatmul.mubr.bf16.gmra.mrb[0].mxu0 %v292
      %v391 = vpop.f32.mrb[0].mxu0
      %v392 = vadd.f32 %v267, %v391
      %v393 = vpop.f32.mrb[0].mxu0
      %v394 = vpop.f32.mrb[0].mxu0
      %v395 = vadd.f32 %v267, %v394
      %v396 = vpop.f32.mrb[0].mxu0
      %397 = vdwg.mxu0
      %v398 = vmax.f32 %v336, 0.0
      %v399 = vmax.f32 %v339, 0.0
      %v400 = vmax.f32 %v344, 0.0
      %v401 = vmax.f32 %v347, 0.0
      %v402 = vmax.f32 %v352, 0.0
      %v403 = vmax.f32 %v355, 0.0
      %v404 = vmax.f32 %v360, 0.0
      %v405 = vmax.f32 %v363, 0.0
      %v406 = vmax.f32 %v368, 0.0
      %v407 = vmax.f32 %v371, 0.0
      %v408 = vmax.f32 %v376, 0.0
      %v409 = vmax.f32 %v379, 0.0
      %v410 = vmax.f32 %v384, 0.0
      %v411 = vmax.f32 %v387, 0.0
      %v412 = vmax.f32 %v392, 0.0
      %v413 = vmax.f32 %v395, 0.0
      %v414 = vpack.c.bf16 %v399, %v398
      %v415 = vpack.c.bf16 %v401, %v400
      %v416 = vpack.c.bf16 %v403, %v402
      %v417 = vpack.c.bf16 %v405, %v404
      %v418 = vpack.c.bf16 %v407, %v406
      %v419 = vpack.c.bf16 %v409, %v408
      %v420 = vpack.c.bf16 %v411, %v410
      %v421 = vpack.c.bf16 %v413, %v412
      %v422 = vld [vmem:[%s1 + $0x90] sm:$0xf]
      %v423 = vld [vmem:[%s1 + $0x94] sm:$0xf]
      %v424 = vld [vmem:[%s1 + $0x98] sm:$0xf]
      %v425 = vld [vmem:[%s1 + $0x9c] sm:$0xf]
      %v430 = vunpack.c.l.b16 %v422
      %v431 = vunpack.c.l.b16 %v423
      %v432 = vunpack.c.l.b16 %v424
      %v433 = vunpack.c.l.b16 %v425
      %v434 = vpack.c.b16 %v431, %v430
      %v435 = vpack.c.b16 %v433, %v432
      %438 = vrot.lane.b32.xlu0 %v259, 64
      %v439 = vpop.permute.xlu0 %438
      %vm441 = vcmask 261120
      %v443 = vsel %vm441, %v414, 0
      %v446 = vsel %vm441, %v415, 0
      %v449 = vsel %vm441, %v416, 0
      %v452 = vsel %vm441, %v417, 0
      %v455 = vsel %vm441, %v418, 0
      %v458 = vsel %vm441, %v419, 0
      %v461 = vsel %vm441, %v420, 0
      %v464 = vsel %vm441, %v421, 0
      %466 = vmatprep.subr.bf16.mxu0 0
      %467 = vmatpush1.bf16.msra.mxu0 %v434
      %468 = vmatprep.subr.bf16.mxu0 0
      %469 = vmatpush1.bf16.msra.mxu0 %v435
      %470 = vmatprep.subr.bf16.mxu0 0
      %471 = vmatpush1.bf16.msra.mxu0 0
      %472 = vmatprep.subr.bf16.mxu0 0
      %473 = vmatpush1.bf16.msra.mxu0 0
      %474 = vmatprep.subr.bf16.mxu0 0
      %475 = vmatpush1.bf16.msra.mxu0 0
      %476 = vmatprep.subr.bf16.mxu0 0
      %477 = vmatpush1.bf16.msra.mxu0 0
      %478 = vmatprep.subr.bf16.mxu0 0
      %479 = vmatpush1.bf16.msra.mxu0 0
      %480 = vmatprep.subr.bf16.mxu0 0
      %481 = vmatpush1.bf16.msra.mxu0 0
      %482 = vmatprep.subr.bf16.mxu0 0
      %483 = vmatpush1.bf16.msra.mxu0 0
      %484 = vmatprep.subr.bf16.mxu0 0
      %485 = vmatpush1.bf16.msra.mxu0 0
      %486 = vmatprep.subr.bf16.mxu0 0
      %487 = vmatpush1.bf16.msra.mxu0 0
      %488 = vmatprep.subr.bf16.mxu0 0
      %489 = vmatpush1.bf16.msra.mxu0 0
      %490 = vmatprep.subr.bf16.mxu0 0
      %491 = vmatpush1.bf16.msra.mxu0 0
      %492 = vmatprep.subr.bf16.mxu0 0
      %493 = vmatpush1.bf16.msra.mxu0 0
      %494 = vmatprep.subr.bf16.mxu0 0
      %495 = vmatpush1.bf16.msra.mxu0 0
      %496 = vmatprep.subr.bf16.mxu0 0
      %497 = vmatpush1.bf16.msra.mxu0 0
      %498 = vmatprep.mubr.bf16.mxu0 0
      %499 = vmatmul.mubr.bf16.gmra.mrb[0].mxu0 %v443
      %v500 = vpop.f32.mrb[0].mxu0
      %v501 = vadd.f32 %v439, %v500
      %v502 = vpop.f32.mrb[0].mxu0
      %v503 = vpop.f32.mrb[0].mxu0
      %v504 = vadd.f32 %v439, %v503
      %v505 = vpop.f32.mrb[0].mxu0
      %506 = vmatprep.mubr.bf16.mxu0 0
      %507 = vmatmul.mubr.bf16.gmra.mrb[0].mxu0 %v446
      %v508 = vpop.f32.mrb[0].mxu0
      %v509 = vadd.f32 %v439, %v508
      %v510 = vpop.f32.mrb[0].mxu0
      %v511 = vpop.f32.mrb[0].mxu0
      %v512 = vadd.f32 %v439, %v511
      %v513 = vpop.f32.mrb[0].mxu0
      %514 = vmatprep.mubr.bf16.mxu0 0
      %515 = vmatmul.mubr.bf16.gmra.mrb[0].mxu0 %v449
      %v516 = vpop.f32.mrb[0].mxu0
      %v517 = vadd.f32 %v439, %v516
      %v518 = vpop.f32.mrb[0].mxu0
      %v519 = vpop.f32.mrb[0].mxu0
      %v520 = vadd.f32 %v439, %v519
      %v521 = vpop.f32.mrb[0].mxu0
      %522 = vmatprep.mubr.bf16.mxu0 0
      %523 = vmatmul.mubr.bf16.gmra.mrb[0].mxu0 %v452
      %v524 = vpop.f32.mrb[0].mxu0
      %v525 = vadd.f32 %v439, %v524
      %v526 = vpop.f32.mrb[0].mxu0
      %v527 = vpop.f32.mrb[0].mxu0
      %v528 = vadd.f32 %v439, %v527
      %v529 = vpop.f32.mrb[0].mxu0
      %530 = vmatprep.mubr.bf16.mxu0 0
      %531 = vmatmul.mubr.bf16.gmra.mrb[0].mxu0 %v455
      %v532 = vpop.f32.mrb[0].mxu0
      %v533 = vadd.f32 %v439, %v532
      %v534 = vpop.f32.mrb[0].mxu0
      %v535 = vpop.f32.mrb[0].mxu0
      %v536 = vadd.f32 %v439, %v535
      %v537 = vpop.f32.mrb[0].mxu0
      %538 = vmatprep.mubr.bf16.mxu0 0
      %539 = vmatmul.mubr.bf16.gmra.mrb[0].mxu0 %v458
      %v540 = vpop.f32.mrb[0].mxu0
      %v541 = vadd.f32 %v439, %v540
      %v542 = vpop.f32.mrb[0].mxu0
      %v543 = vpop.f32.mrb[0].mxu0
      %v544 = vadd.f32 %v439, %v543
      %v545 = vpop.f32.mrb[0].mxu0
      %546 = vmatprep.mubr.bf16.mxu0 0
      %547 = vmatmul.mubr.bf16.gmra.mrb[0].mxu0 %v461
      %v548 = vpop.f32.mrb[0].mxu0
      %v549 = vadd.f32 %v439, %v548
      %v550 = vpop.f32.mrb[0].mxu0
      %v551 = vpop.f32.mrb[0].mxu0
      %v552 = vadd.f32 %v439, %v551
      %v553 = vpop.f32.mrb[0].mxu0
      %554 = vmatprep.mubr.bf16.mxu0 0
      %555 = vmatmul.mubr.bf16.gmra.mrb[0].mxu0 %v464
      %v556 = vpop.f32.mrb[0].mxu0
      %v557 = vadd.f32 %v439, %v556
      %v558 = vpop.f32.mrb[0].mxu0
      %v559 = vpop.f32.mrb[0].mxu0
      %v560 = vadd.f32 %v439, %v559
      %v561 = vpop.f32.mrb[0].mxu0
      %562 = vdwg.mxu0
      %v563 = vmax.f32 %v501, 0.0
      %v564 = vmax.f32 %v504, 0.0
      %v565 = vmax.f32 %v509, 0.0
      %v566 = vmax.f32 %v512, 0.0
      %v567 = vmax.f32 %v517, 0.0
      %v568 = vmax.f32 %v520, 0.0
      %v569 = vmax.f32 %v525, 0.0
      %v570 = vmax.f32 %v528, 0.0
      %v571 = vmax.f32 %v533, 0.0
      %v572 = vmax.f32 %v536, 0.0
      %v573 = vmax.f32 %v541, 0.0
      %v574 = vmax.f32 %v544, 0.0
      %v575 = vmax.f32 %v549, 0.0
      %v576 = vmax.f32 %v552, 0.0
      %v577 = vmax.f32 %v557, 0.0
      %v578 = vmax.f32 %v560, 0.0
      %v579 = vpack.c.bf16 %v564, %v563
      %v580 = vpack.c.bf16 %v566, %v565
      %v581 = vpack.c.bf16 %v568, %v567
      %v582 = vpack.c.bf16 %v570, %v569
      %v583 = vpack.c.bf16 %v572, %v571
      %v584 = vpack.c.bf16 %v574, %v573
      %v585 = vpack.c.bf16 %v576, %v575
      %v586 = vpack.c.bf16 %v578, %v577
      %587 = vrot.lane.b32.xlu0 %v434, 96
      %v588 = vpop.permute.xlu0 %587
      %589 = vrot.lane.b32.xlu0 %v435, 96
      %v590 = vpop.permute.xlu0 %589
      %593 = vrot.lane.b32.xlu0 %v259, 32
      %v594 = vpop.permute.xlu0 %593
      %v597 = vsel %vm441, %v579, 0
      %v600 = vsel %vm441, %v580, 0
      %v603 = vsel %vm441, %v581, 0
      %v606 = vsel %vm441, %v582, 0
      %v609 = vsel %vm441, %v583, 0
      %v612 = vsel %vm441, %v584, 0
      %v615 = vsel %vm441, %v585, 0
      %v618 = vsel %vm441, %v586, 0
      %620 = vmatprep.subr.bf16.mxu0 0
      %621 = vmatpush1.bf16.msra.mxu0 %v588
      %622 = vmatprep.subr.bf16.mxu0 0
      %623 = vmatpush1.bf16.msra.mxu0 %v590
      %624 = vmatprep.subr.bf16.mxu0 0
      %625 = vmatpush1.bf16.msra.mxu0 0
      %626 = vmatprep.subr.bf16.mxu0 0
      %627 = vmatpush1.bf16.msra.mxu0 0
      %628 = vmatprep.subr.bf16.mxu0 0
      %629 = vmatpush1.bf16.msra.mxu0 0
      %630 = vmatprep.subr.bf16.mxu0 0
      %631 = vmatpush1.bf16.msra.mxu0 0
      %632 = vmatprep.subr.bf16.mxu0 0
      %633 = vmatpush1.bf16.msra.mxu0 0
      %634 = vmatprep.subr.bf16.mxu0 0
      %635 = vmatpush1.bf16.msra.mxu0 0
      %636 = vmatprep.subr.bf16.mxu0 0
      %637 = vmatpush1.bf16.msra.mxu0 0
      %638 = vmatprep.subr.bf16.mxu0 0
      %639 = vmatpush1.bf16.msra.mxu0 0
      %640 = vmatprep.subr.bf16.mxu0 0
      %641 = vmatpush1.bf16.msra.mxu0 0
      %642 = vmatprep.subr.bf16.mxu0 0
      %643 = vmatpush1.bf16.msra.mxu0 0
      %644 = vmatprep.subr.bf16.mxu0 0
      %645 = vmatpush1.bf16.msra.mxu0 0
      %646 = vmatprep.subr.bf16.mxu0 0
      %647 = vmatpush1.bf16.msra.mxu0 0
      %648 = vmatprep.subr.bf16.mxu0 0
      %649 = vmatpush1.bf16.msra.mxu0 0
      %650 = vmatprep.subr.bf16.mxu0 0
      %651 = vmatpush1.bf16.msra.mxu0 0
      %652 = vmatprep.mubr.bf16.mxu0 0
      %653 = vmatmul.mubr.bf16.gmra.mrb[0].mxu0 %v597
      %v654 = vpop.f32.mrb[0].mxu0
      %v655 = vadd.f32 %v594, %v654
      %v656 = vpop.f32.mrb[0].mxu0
      %v657 = vpop.f32.mrb[0].mxu0
      %v658 = vadd.f32 %v594, %v657
      %v659 = vpop.f32.mrb[0].mxu0
      %660 = vmatprep.mubr.bf16.mxu0 0
      %661 = vmatmul.mubr.bf16.gmra.mrb[0].mxu0 %v600
      %v662 = vpop.f32.mrb[0].mxu0
      %v663 = vadd.f32 %v594, %v662
      %v664 = vpop.f32.mrb[0].mxu0
      %v665 = vpop.f32.mrb[0].mxu0
      %v666 = vadd.f32 %v594, %v665
      %v667 = vpop.f32.mrb[0].mxu0
      %668 = vmatprep.mubr.bf16.mxu0 0
      %669 = vmatmul.mubr.bf16.gmra.mrb[0].mxu0 %v603
      %v670 = vpop.f32.mrb[0].mxu0
      %v671 = vadd.f32 %v594, %v670
      %v672 = vpop.f32.mrb[0].mxu0
      %v673 = vpop.f32.mrb[0].mxu0
      %v674 = vadd.f32 %v594, %v673
      %v675 = vpop.f32.mrb[0].mxu0
      %676 = vmatprep.mubr.bf16.mxu0 0
      %677 = vmatmul.mubr.bf16.gmra.mrb[0].mxu0 %v606
      %v678 = vpop.f32.mrb[0].mxu0
      %v679 = vadd.f32 %v594, %v678
      %v680 = vpop.f32.mrb[0].mxu0
      %v681 = vpop.f32.mrb[0].mxu0
      %v682 = vadd.f32 %v594, %v681
      %v683 = vpop.f32.mrb[0].mxu0
      %684 = vmatprep.mubr.bf16.mxu0 0
      %685 = vmatmul.mubr.bf16.gmra.mrb[0].mxu0 %v609
      %v686 = vpop.f32.mrb[0].mxu0
      %v687 = vadd.f32 %v594, %v686
      %v688 = vpop.f32.mrb[0].mxu0
      %v689 = vpop.f32.mrb[0].mxu0
      %v690 = vadd.f32 %v594, %v689
      %v691 = vpop.f32.mrb[0].mxu0
      %692 = vmatprep.mubr.bf16.mxu0 0
      %693 = vmatmul.mubr.bf16.gmra.mrb[0].mxu0 %v612
      %v694 = vpop.f32.mrb[0].mxu0
      %v695 = vadd.f32 %v594, %v694
      %v696 = vpop.f32.mrb[0].mxu0
      %v697 = vpop.f32.mrb[0].mxu0
      %v698 = vadd.f32 %v594, %v697
      %v699 = vpop.f32.mrb[0].mxu0
      %700 = vmatprep.mubr.bf16.mxu0 0
      %701 = vmatmul.mubr.bf16.gmra.mrb[0].mxu0 %v615
      %v702 = vpop.f32.mrb[0].mxu0
      %v703 = vadd.f32 %v594, %v702
      %v704 = vpop.f32.mrb[0].mxu0
      %v705 = vpop.f32.mrb[0].mxu0
      %v706 = vadd.f32 %v594, %v705
      %v707 = vpop.f32.mrb[0].mxu0
      %708 = vmatprep.mubr.bf16.mxu0 0
      %709 = vmatmul.mubr.bf16.gmra.mrb[0].mxu0 %v618
      %v710 = vpop.f32.mrb[0].mxu0
      %v711 = vadd.f32 %v594, %v710
      %v712 = vpop.f32.mrb[0].mxu0
      %v713 = vpop.f32.mrb[0].mxu0
      %v714 = vadd.f32 %v594, %v713
      %v715 = vpop.f32.mrb[0].mxu0
      %716 = vdwg.mxu0
      %v717 = vld [vmem:[%s1 + $0xa0] sm:$0x7]
      %v719 = vand.u32 %v717, %v297
      %721 = vmatprep.subr.bf16.mxu0 0
      %722 = vmatpush1.bf16.msra.mxu0 %v719
      %723 = vmatprep.subr.bf16.mxu0 0
      %724 = vmatpush1.bf16.msra.mxu0 0
      %725 = vmatprep.subr.bf16.mxu0 0
      %726 = vmatpush1.bf16.msra.mxu0 0
      %727 = vmatprep.subr.bf16.mxu0 0
      %728 = vmatpush1.bf16.msra.mxu0 0
      %729 = vmatprep.subr.bf16.mxu0 0
      %730 = vmatpush1.bf16.msra.mxu0 0
      %731 = vmatprep.subr.bf16.mxu0 0
      %732 = vmatpush1.bf16.msra.mxu0 0
      %733 = vmatprep.subr.bf16.mxu0 0
      %734 = vmatpush1.bf16.msra.mxu0 0
      %735 = vmatprep.subr.bf16.mxu0 0
      %736 = vmatpush1.bf16.msra.mxu0 0
      %737 = vmatprep.subr.bf16.mxu0 0
      %738 = vmatpush1.bf16.msra.mxu0 0
      %739 = vmatprep.subr.bf16.mxu0 0
      %740 = vmatpush1.bf16.msra.mxu0 0
      %741 = vmatprep.subr.bf16.mxu0 0
      %742 = vmatpush1.bf16.msra.mxu0 0
      %743 = vmatprep.subr.bf16.mxu0 0
      %744 = vmatpush1.bf16.msra.mxu0 0
      %745 = vmatprep.subr.bf16.mxu0 0
      %746 = vmatpush1.bf16.msra.mxu0 0
      %747 = vmatprep.subr.bf16.mxu0 0
      %748 = vmatpush1.bf16.msra.mxu0 0
      %749 = vmatprep.subr.bf16.mxu0 0
      %750 = vmatpush1.bf16.msra.mxu0 0
      %751 = vmatprep.subr.bf16.mxu0 0
      %752 = vmatpush1.bf16.msra.mxu0 0
      %753 = vmatprep.mubr.bf16.mxu0 0
      %754 = vmatmul.mubr.bf16.gmra.mrb[0].mxu0 %v271
      %v755 = vpop.f32.mrb[0].mxu0
      %v756 = vadd.f32 0.0, %v755
      %v757 = vpop.f32.mrb[0].mxu0
      %v758 = vpop.f32.mrb[0].mxu0
      %v759 = vadd.f32 0.0, %v758
      %v760 = vpop.f32.mrb[0].mxu0
      %761 = vmatprep.mubr.bf16.mxu0 0
      %762 = vmatmul.mubr.bf16.gmra.mrb[0].mxu0 %v274
      %v763 = vpop.f32.mrb[0].mxu0
      %v764 = vadd.f32 0.0, %v763
      %v765 = vpop.f32.mrb[0].mxu0
      %v766 = vpop.f32.mrb[0].mxu0
      %v767 = vadd.f32 0.0, %v766
      %v768 = vpop.f32.mrb[0].mxu0
      %769 = vmatprep.mubr.bf16.mxu0 0
      %770 = vmatmul.mubr.bf16.gmra.mrb[0].mxu0 %v277
      %v771 = vpop.f32.mrb[0].mxu0
      %v772 = vadd.f32 0.0, %v771
      %v773 = vpop.f32.mrb[0].mxu0
      %v774 = vpop.f32.mrb[0].mxu0
      %v775 = vadd.f32 0.0, %v774
      %v776 = vpop.f32.mrb[0].mxu0
      %777 = vmatprep.mubr.bf16.mxu0 0
      %778 = vmatmul.mubr.bf16.gmra.mrb[0].mxu0 %v280
      %v779 = vpop.f32.mrb[0].mxu0
      %v780 = vadd.f32 0.0, %v779
      %v781 = vpop.f32.mrb[0].mxu0
      %v782 = vpop.f32.mrb[0].mxu0
      %v783 = vadd.f32 0.0, %v782
      %v784 = vpop.f32.mrb[0].mxu0
      %785 = vmatprep.mubr.bf16.mxu0 0
      %786 = vmatmul.mubr.bf16.gmra.mrb[0].mxu0 %v283
      %v787 = vpop.f32.mrb[0].mxu0
      %v788 = vadd.f32 0.0, %v787
      %v789 = vpop.f32.mrb[0].mxu0
      %v790 = vpop.f32.mrb[0].mxu0
      %v791 = vadd.f32 0.0, %v790
      %v792 = vpop.f32.mrb[0].mxu0
      %793 = vmatprep.mubr.bf16.mxu0 0
      %794 = vmatmul.mubr.bf16.gmra.mrb[0].mxu0 %v286
      %v795 = vpop.f32.mrb[0].mxu0
      %v796 = vadd.f32 0.0, %v795
      %v797 = vpop.f32.mrb[0].mxu0
      %v798 = vpop.f32.mrb[0].mxu0
      %v799 = vadd.f32 0.0, %v798
      %v800 = vpop.f32.mrb[0].mxu0
      %801 = vmatprep.mubr.bf16.mxu0 0
      %802 = vmatmul.mubr.bf16.gmra.mrb[0].mxu0 %v289
      %v803 = vpop.f32.mrb[0].mxu0
      %v804 = vadd.f32 0.0, %v803
      %v805 = vpop.f32.mrb[0].mxu0
      %v806 = vpop.f32.mrb[0].mxu0
      %v807 = vadd.f32 0.0, %v806
      %v808 = vpop.f32.mrb[0].mxu0
      %809 = vmatprep.mubr.bf16.mxu0 0
      %810 = vmatmul.mubr.bf16.gmra.mrb[0].mxu0 %v292
      %v811 = vpop.f32.mrb[0].mxu0
      %v812 = vadd.f32 0.0, %v811
      %v813 = vpop.f32.mrb[0].mxu0
      %v814 = vpop.f32.mrb[0].mxu0
      %v815 = vadd.f32 0.0, %v814
      %v816 = vpop.f32.mrb[0].mxu0
      %817 = vdwg.mxu0
      %v818 = vlaneseq
      %v819 = vand.u32 %v818, 127
      %vm820 = vcmp.lt.s32.totalorder %v819, 3
      %vm821 = vcmp.ge.s32.totalorder %v819, 19
      %vm822 = vcmp.lt.s32.totalorder %v819, 21
      %vm823 = vmand %vm821, %vm822
      %v824 = vtanh.pop %v655
      %v825 = vtanh.pop %v658
      %v826 = vtanh.pop %v663
      %v827 = vtanh.pop %v666
      %v828 = vtanh.pop %v671
      %v829 = vtanh.pop %v674
      %v830 = vtanh.pop %v679
      %v831 = vtanh.pop %v682
      %v832 = vtanh.pop %v687
      %v833 = vtanh.pop %v690
      %v834 = vtanh.pop %v695
      %v835 = vtanh.pop %v698
      %v836 = vtanh.pop %v703
      %v837 = vtanh.pop %v706
      %v838 = vtanh.pop %v711
      %v839 = vtanh.pop %v714
      %v840 = vadd.f32 %v824, %v756
      %v841 = vadd.f32 %v825, %v759
      %v842 = vadd.f32 %v826, %v764
      %v843 = vadd.f32 %v827, %v767
      %v844 = vadd.f32 %v828, %v772
      %v845 = vadd.f32 %v829, %v775
      %v846 = vadd.f32 %v830, %v780
      %v847 = vadd.f32 %v831, %v783
      %v848 = vadd.f32 %v832, %v788
      %v849 = vadd.f32 %v833, %v791
      %v850 = vadd.f32 %v834, %v796
      %v851 = vadd.f32 %v835, %v799
      %v852 = vadd.f32 %v836, %v804
      %v853 = vadd.f32 %v837, %v807
      %v854 = vadd.f32 %v838, %v812
      %v855 = vadd.f32 %v839, %v815
      %v856 = vxor.u32 %v655, 2147483648
      %v857 = vxor.u32 %v658, 2147483648
      %v858 = vxor.u32 %v663, 2147483648
      %v859 = vxor.u32 %v666, 2147483648
      %v860 = vxor.u32 %v671, 2147483648
      %v861 = vxor.u32 %v674, 2147483648
      %v862 = vxor.u32 %v679, 2147483648
      %v863 = vxor.u32 %v682, 2147483648
      %v864 = vxor.u32 %v687, 2147483648
      %v865 = vxor.u32 %v690, 2147483648
      %v866 = vxor.u32 %v695, 2147483648
      %v867 = vxor.u32 %v698, 2147483648
      %v868 = vxor.u32 %v703, 2147483648
      %v869 = vxor.u32 %v706, 2147483648
      %v870 = vxor.u32 %v711, 2147483648
      %v871 = vxor.u32 %v714, 2147483648
      %v872 = vmul.f32 %v856, 1.442695
      %v873 = vpow.pop %v872
      %v874 = vmul.f32 %v857, 1.442695
      %v875 = vpow.pop %v874
      %v876 = vmul.f32 %v858, 1.442695
      %v877 = vpow.pop %v876
      %v878 = vmul.f32 %v859, 1.442695
      %v879 = vpow.pop %v878
      %v880 = vmul.f32 %v860, 1.442695
      %v881 = vpow.pop %v880
      %v882 = vmul.f32 %v861, 1.442695
      %v883 = vpow.pop %v882
      %v884 = vmul.f32 %v862, 1.442695
      %v885 = vpow.pop %v884
      %v886 = vmul.f32 %v863, 1.442695
      %v887 = vpow.pop %v886
      %v888 = vmul.f32 %v864, 1.442695
      %v889 = vpow.pop %v888
      %v890 = vmul.f32 %v865, 1.442695
      %v891 = vpow.pop %v890
      %v892 = vmul.f32 %v866, 1.442695
      %v893 = vpow.pop %v892
      %v894 = vmul.f32 %v867, 1.442695
      %v895 = vpow.pop %v894
      %v896 = vmul.f32 %v868, 1.442695
      %v897 = vpow.pop %v896
      %v898 = vmul.f32 %v869, 1.442695
      %v899 = vpow.pop %v898
      %v900 = vmul.f32 %v870, 1.442695
      %v901 = vpow.pop %v900
      %v902 = vmul.f32 %v871, 1.442695
      %v903 = vpow.pop %v902
      %v904 = vadd.f32 %v873, 1.0
      %v905 = vadd.f32 %v875, 1.0
      %v906 = vadd.f32 %v877, 1.0
      %v907 = vadd.f32 %v879, 1.0
      %v908 = vadd.f32 %v881, 1.0
      %v909 = vadd.f32 %v883, 1.0
      %v910 = vadd.f32 %v885, 1.0
      %v911 = vadd.f32 %v887, 1.0
      %v912 = vadd.f32 %v889, 1.0
      %v913 = vadd.f32 %v891, 1.0
      %v914 = vadd.f32 %v893, 1.0
      %v915 = vadd.f32 %v895, 1.0
      %v916 = vadd.f32 %v897, 1.0
      %v917 = vadd.f32 %v899, 1.0
      %v918 = vadd.f32 %v901, 1.0
      %v919 = vadd.f32 %v903, 1.0
      %v920 = vrcp.pop %v904
      %v921 = vmul.f32 1.0, %v920
      %v922 = vrcp.pop %v905
      %v923 = vmul.f32 1.0, %v922
      %v924 = vrcp.pop %v906
      %v925 = vmul.f32 1.0, %v924
      %v926 = vrcp.pop %v907
      %v927 = vmul.f32 1.0, %v926
      %v928 = vrcp.pop %v908
      %v929 = vmul.f32 1.0, %v928
      %v930 = vrcp.pop %v909
      %v931 = vmul.f32 1.0, %v930
      %v932 = vrcp.pop %v910
      %v933 = vmul.f32 1.0, %v932
      %v934 = vrcp.pop %v911
      %v935 = vmul.f32 1.0, %v934
      %v936 = vrcp.pop %v912
      %v937 = vmul.f32 1.0, %v936
      %v938 = vrcp.pop %v913
      %v939 = vmul.f32 1.0, %v938
      %v940 = vrcp.pop %v914
      %v941 = vmul.f32 1.0, %v940
      %v942 = vrcp.pop %v915
      %v943 = vmul.f32 1.0, %v942
      %v944 = vrcp.pop %v916
      %v945 = vmul.f32 1.0, %v944
      %v946 = vrcp.pop %v917
      %v947 = vmul.f32 1.0, %v946
      %v948 = vrcp.pop %v918
      %v949 = vmul.f32 1.0, %v948
      %v950 = vrcp.pop %v919
      %v951 = vmul.f32 1.0, %v950
      %v952 = vmul.f32 %v921, 2.0
      %v953 = vmul.f32 %v923, 2.0
      %v954 = vmul.f32 %v925, 2.0
      %v955 = vmul.f32 %v927, 2.0
      %v956 = vmul.f32 %v929, 2.0
      %v957 = vmul.f32 %v931, 2.0
      %v958 = vmul.f32 %v933, 2.0
      %v959 = vmul.f32 %v935, 2.0
      %v960 = vmul.f32 %v937, 2.0
      %v961 = vmul.f32 %v939, 2.0
      %v962 = vmul.f32 %v941, 2.0
      %v963 = vmul.f32 %v943, 2.0
      %v964 = vmul.f32 %v945, 2.0
      %v965 = vmul.f32 %v947, 2.0
      %v966 = vmul.f32 %v949, 2.0
      %v967 = vmul.f32 %v951, 2.0
      %v968 = vsel %vm823, %v952, %v655
      %v969 = vsel %vm823, %v953, %v658
      %v970 = vsel %vm823, %v954, %v663
      %v971 = vsel %vm823, %v955, %v666
      %v972 = vsel %vm823, %v956, %v671
      %v973 = vsel %vm823, %v957, %v674
      %v974 = vsel %vm823, %v958, %v679
      %v975 = vsel %vm823, %v959, %v682
      %v976 = vsel %vm823, %v960, %v687
      %v977 = vsel %vm823, %v961, %v690
      %v978 = vsel %vm823, %v962, %v695
      %v979 = vsel %vm823, %v963, %v698
      %v980 = vsel %vm823, %v964, %v703
      %v981 = vsel %vm823, %v965, %v706
      %v982 = vsel %vm823, %v966, %v711
      %v983 = vsel %vm823, %v967, %v714
      %v984 = vsel %vm820, %v840, %v968
      %v985 = vsel %vm820, %v841, %v969
      %v986 = vsel %vm820, %v842, %v970
      %v987 = vsel %vm820, %v843, %v971
      %v988 = vsel %vm820, %v844, %v972
      %v989 = vsel %vm820, %v845, %v973
      %v990 = vsel %vm820, %v846, %v974
      %v991 = vsel %vm820, %v847, %v975
      %v992 = vsel %vm820, %v848, %v976
      %v993 = vsel %vm820, %v849, %v977
      %v994 = vsel %vm820, %v850, %v978
      %v995 = vsel %vm820, %v851, %v979
      %v996 = vsel %vm820, %v852, %v980
      %v997 = vsel %vm820, %v853, %v981
      %v998 = vsel %vm820, %v854, %v982
      %v999 = vsel %vm820, %v855, %v983
      %vm1000 = vcmask 220160
      %1001 = vst.msk [vmem:[%s214] sm:$0xff] %vm1000, %v984
      %1002 = vst.msk [vmem:[%s214 + $0x8] sm:$0xff] %vm1000, %v985
      %1003 = vst.msk [vmem:[%s214 + $0x10] sm:$0xff] %vm1000, %v986
      %1004 = vst.msk [vmem:[%s214 + $0x18] sm:$0xff] %vm1000, %v987
      %1005 = vst.msk [vmem:[%s214 + $0x20] sm:$0xff] %vm1000, %v988
      %1006 = vst.msk [vmem:[%s214 + $0x28] sm:$0xff] %vm1000, %v989
      %1007 = vst.msk [vmem:[%s214 + $0x30] sm:$0xff] %vm1000, %v990
      %1008 = vst.msk [vmem:[%s214 + $0x38] sm:$0xff] %vm1000, %v991
      %1009 = vst.msk [vmem:[%s214 + $0x40] sm:$0xff] %vm1000, %v992
      %1010 = vst.msk [vmem:[%s214 + $0x48] sm:$0xff] %vm1000, %v993
      %1011 = vst.msk [vmem:[%s214 + $0x50] sm:$0xff] %vm1000, %v994
      %1012 = vst.msk [vmem:[%s214 + $0x58] sm:$0xff] %vm1000, %v995
      %1013 = vst.msk [vmem:[%s214 + $0x60] sm:$0xff] %vm1000, %v996
      %1014 = vst.msk [vmem:[%s214 + $0x68] sm:$0xff] %vm1000, %v997
      %1015 = vst.msk [vmem:[%s214 + $0x70] sm:$0xff] %vm1000, %v998
      %1016 = vst.msk [vmem:[%s214 + $0x78] sm:$0xff] %vm1000, %v999
      %v1017 = vpack.c.bf16 %v985, %v984
      %v1018 = vpack.c.bf16 %v987, %v986
      %v1019 = vpack.c.bf16 %v989, %v988
      %v1020 = vpack.c.bf16 %v991, %v990
      %v1021 = vpack.c.bf16 %v993, %v992
      %v1022 = vpack.c.bf16 %v995, %v994
      %v1023 = vpack.c.bf16 %v997, %v996
      %v1024 = vpack.c.bf16 %v999, %v998
      %v1025 = vld [vmem:[%s1 + $0x88] sm:$0xf]
      %v1026 = vld [vmem:[%s1 + $0x8c] sm:$0xf]
      %v1029 = vunpack.c.l.b16 %v1025
      %v1030 = vunpack.c.l.b16 %v1026
      %v1031 = vpack.c.b16 %v1030, %v1029
      %1033 = vmatprep.subr.bf16.mxu0 0
      %1034 = vmatpush1.bf16.msra.mxu0 %v1017
      %1035 = vmatprep.subr.bf16.mxu0 0
      %1036 = vmatpush1.bf16.msra.mxu0 %v1018
      %1037 = vmatprep.subr.bf16.mxu0 0
      %1038 = vmatpush1.bf16.msra.mxu0 %v1019
      %1039 = vmatprep.subr.bf16.mxu0 0
      %1040 = vmatpush1.bf16.msra.mxu0 %v1020
      %1041 = vmatprep.subr.bf16.mxu0 0
      %1042 = vmatpush1.bf16.msra.mxu0 %v1021
      %1043 = vmatprep.subr.bf16.mxu0 0
      %1044 = vmatpush1.bf16.msra.mxu0 %v1022
      %1045 = vmatprep.subr.bf16.mxu0 0
      %1046 = vmatpush1.bf16.msra.mxu0 %v1023
      %1047 = vmatprep.subr.bf16.mxu0 0
      %1048 = vmatpush1.bf16.msra.mxu0 %v1024
      %1049 = vmatprep.subr.bf16.mxu0 0
      %1050 = vmatpush1.bf16.msra.mxu0 0
      %1051 = vmatprep.subr.bf16.mxu0 0
      %1052 = vmatpush1.bf16.msra.mxu0 0
      %1053 = vmatprep.subr.bf16.mxu0 0
      %1054 = vmatpush1.bf16.msra.mxu0 0
      %1055 = vmatprep.subr.bf16.mxu0 0
      %1056 = vmatpush1.bf16.msra.mxu0 0
      %1057 = vmatprep.subr.bf16.mxu0 0
      %1058 = vmatpush1.bf16.msra.mxu0 0
      %1059 = vmatprep.subr.bf16.mxu0 0
      %1060 = vmatpush1.bf16.msra.mxu0 0
      %1061 = vmatprep.subr.bf16.mxu0 0
      %1062 = vmatpush1.bf16.msra.mxu0 0
      %1063 = vmatprep.subr.bf16.mxu0 0
      %1064 = vmatpush1.bf16.msra.mxu0 0
      %1065 = vmatprep.mubr.bf16.mxu0 0
      %1066 = vmatmul.mubr.bf16.gmra.mrb[0].mxu0 %v1031
      %v1067 = vpop.f32.mrb[0].mxu0
      %v1068 = vadd.f32 0.0, %v1067
      %v1069 = vpop.f32.mrb[0].mxu0
      %v1070 = vpop.f32.mrb[0].mxu0
      %v1071 = vadd.f32 0.0, %v1070
      %v1072 = vpop.f32.mrb[0].mxu0
      %1073 = vdwg.mxu0
      %v1074 = vpack.c.bf16 %v1071, %v1068
      %v1075 = vld [vmem:[%s1] sm:$0xf]
      %v1076 = vld [vmem:[%s1 + $0x4] sm:$0xf]
      %v1077 = vld [vmem:[%s1 + $0x8] sm:$0x7]
      %v1081 = vunpack.c.l.b16 %v1075
      %v1082 = vunpack.c.l.b16 %v1076
      %v1083 = vunpack.c.l.b16 %v1077
      %v1084 = vpack.c.b16 %v1082, %v1081
      %v1085 = vpack.c.b16 %v1083, %v1083
      %1086 = vrot.lane.b32.xlu0 %v1084, 64
      %v1087 = vpop.permute.xlu0 %1086
      %1088 = vrot.lane.b32.xlu0 %v1085, 64
      %v1089 = vpop.permute.xlu0 %1088
      %vm1091 = vcmask 179200
      %v1093 = vsel %vm1091, %v1074, 0
      %v1096 = vsel %vm295, %v1089, 0
      %1098 = vmatprep.subr.bf16.mxu0 0
      %1099 = vmatpush1.bf16.msra.mxu0 %v1087
      %1100 = vmatprep.subr.bf16.mxu0 0
      %1101 = vmatpush1.bf16.msra.mxu0 %v1096
      %1102 = vmatprep.subr.bf16.mxu0 0
      %1103 = vmatpush1.bf16.msra.mxu0 0
      %1104 = vmatprep.subr.bf16.mxu0 0
      %1105 = vmatpush1.bf16.msra.mxu0 0
      %1106 = vmatprep.subr.bf16.mxu0 0
      %1107 = vmatpush1.bf16.msra.mxu0 0
      %1108 = vmatprep.subr.bf16.mxu0 0
      %1109 = vmatpush1.bf16.msra.mxu0 0
      %1110 = vmatprep.subr.bf16.mxu0 0
      %1111 = vmatpush1.bf16.msra.mxu0 0
      %1112 = vmatprep.subr.bf16.mxu0 0
      %1113 = vmatpush1.bf16.msra.mxu0 0
      %1114 = vmatprep.subr.bf16.mxu0 0
      %1115 = vmatpush1.bf16.msra.mxu0 0
      %1116 = vmatprep.subr.bf16.mxu0 0
      %1117 = vmatpush1.bf16.msra.mxu0 0
      %1118 = vmatprep.subr.bf16.mxu0 0
      %1119 = vmatpush1.bf16.msra.mxu0 0
      %1120 = vmatprep.subr.bf16.mxu0 0
      %1121 = vmatpush1.bf16.msra.mxu0 0
      %1122 = vmatprep.subr.bf16.mxu0 0
      %1123 = vmatpush1.bf16.msra.mxu0 0
      %1124 = vmatprep.subr.bf16.mxu0 0
      %1125 = vmatpush1.bf16.msra.mxu0 0
      %1126 = vmatprep.subr.bf16.mxu0 0
      %1127 = vmatpush1.bf16.msra.mxu0 0
      %1128 = vmatprep.subr.bf16.mxu0 0
      %1129 = vmatpush1.bf16.msra.mxu0 0
      %1130 = vmatprep.mubr.bf16.mxu0 0
      %1131 = vmatmul.mubr.bf16.gmra.mrb[0].mxu0 %v1093
      %v1132 = vpop.f32.mrb[0].mxu0
      %v1133 = vadd.f32 0.0, %v1132
      %v1134 = vpop.f32.mrb[0].mxu0
      %v1135 = vpop.f32.mrb[0].mxu0
      %v1136 = vadd.f32 0.0, %v1135
      %v1137 = vpop.f32.mrb[0].mxu0
      %1138 = vdwg.mxu0
      %v1139 = vpack.c.bf16 %v1136, %v1133
      %1141 = vrot.lane.b32.xlu0 %v1074, 32
      %v1142 = vpop.permute.xlu0 %1141
      %v1145 = vsel %vm441, %v1139, %v1142
      %v1147 = vsub.bf16 0, %v1074
      %1149 = vrot.lane.b32.xlu0 %v1139, 96
      %v1150 = vpop.permute.xlu0 %1149
      %1152 = vrot.lane.b32.xlu0 %v1147, 32
      %v1153 = vpop.permute.xlu0 %1152
      %v1156 = vsel %vm441, %v1150, %v1153
      %v1158 = vld [vmem:[%s1] sm:$0xf]
      %v1159 = vld [vmem:[%s1 + $0x4] sm:$0xf]
      %v1160 = vld [vmem:[%s1 + $0x8] sm:$0xf]
      %v1161 = vld [vmem:[%s1 + $0xc] sm:$0xf]
      %v1162 = vld [vmem:[%s1 + $0x10] sm:$0xf]
      %v1163 = vld [vmem:[%s1 + $0x14] sm:$0xf]
      %v1164 = vld [vmem:[%s1 + $0x18] sm:$0xf]
      %v1165 = vld [vmem:[%s1 + $0x1c] sm:$0xf]
      %v1166 = vld [vmem:[%s1 + $0x20] sm:$0xf]
      %v1167 = vld [vmem:[%s1 + $0x24] sm:$0xf]
      %v1168 = vld [vmem:[%s1 + $0x28] sm:$0xf]
      %v1169 = vld [vmem:[%s1 + $0x2c] sm:$0xf]
      %v1170 = vld [vmem:[%s1 + $0x30] sm:$0xf]
      %v1171 = vld [vmem:[%s1 + $0x34] sm:$0xf]
      %v1172 = vld [vmem:[%s1 + $0x38] sm:$0xf]
      %v1173 = vld [vmem:[%s1 + $0x3c] sm:$0xf]
      %v1174 = vld [vmem:[%s1 + $0x40] sm:$0xf]
      %v1175 = vld [vmem:[%s1 + $0x44] sm:$0xf]
      %v1176 = vld [vmem:[%s1 + $0x48] sm:$0xf]
      %v1177 = vld [vmem:[%s1 + $0x4c] sm:$0xf]
      %v1178 = vld [vmem:[%s1 + $0x50] sm:$0xf]
      %v1179 = vld [vmem:[%s1 + $0x54] sm:$0xf]
      %v1180 = vld [vmem:[%s1 + $0x58] sm:$0xf]
      %v1181 = vld [vmem:[%s1 + $0x5c] sm:$0xf]
      %v1182 = vld [vmem:[%s1 + $0x60] sm:$0xf]
      %v1183 = vld [vmem:[%s1 + $0x64] sm:$0xf]
      %v1184 = vld [vmem:[%s1 + $0x68] sm:$0xf]
      %v1185 = vld [vmem:[%s1 + $0x6c] sm:$0xf]
      %v1186 = vld [vmem:[%s1 + $0x70] sm:$0xf]
      %v1187 = vld [vmem:[%s1 + $0x74] sm:$0xf]
      %v1218 = vunpack.c.l.b16 %v1158
      %v1219 = vunpack.c.l.b16 %v1159
      %v1220 = vunpack.c.l.b16 %v1160
      %v1221 = vunpack.c.l.b16 %v1161
      %v1222 = vunpack.c.l.b16 %v1162
      %v1223 = vunpack.c.l.b16 %v1163
      %v1224 = vunpack.c.l.b16 %v1164
      %v1225 = vunpack.c.l.b16 %v1165
      %v1226 = vunpack.c.l.b16 %v1166
      %v1227 = vunpack.c.l.b16 %v1167
      %v1228 = vunpack.c.l.b16 %v1168
      %v1229 = vunpack.c.l.b16 %v1169
      %v1230 = vunpack.c.l.b16 %v1170
      %v1231 = vunpack.c.l.b16 %v1171
      %v1232 = vunpack.c.l.b16 %v1172
      %v1233 = vunpack.c.l.b16 %v1173
      %v1234 = vunpack.c.l.b16 %v1174
      %v1235 = vunpack.c.l.b16 %v1175
      %v1236 = vunpack.c.l.b16 %v1176
      %v1237 = vunpack.c.l.b16 %v1177
      %v1238 = vunpack.c.l.b16 %v1178
      %v1239 = vunpack.c.l.b16 %v1179
      %v1240 = vunpack.c.l.b16 %v1180
      %v1241 = vunpack.c.l.b16 %v1181
      %v1242 = vunpack.c.l.b16 %v1182
      %v1243 = vunpack.c.l.b16 %v1183
      %v1244 = vunpack.c.l.b16 %v1184
      %v1245 = vunpack.c.l.b16 %v1185
      %v1246 = vunpack.c.l.b16 %v1186
      %v1247 = vunpack.c.l.b16 %v1187
      %v1248 = vpack.c.b16 %v1219, %v1218
      %v1249 = vpack.c.b16 %v1221, %v1220
      %v1250 = vpack.c.b16 %v1223, %v1222
      %v1251 = vpack.c.b16 %v1225, %v1224
      %v1252 = vpack.c.b16 %v1227, %v1226
      %v1253 = vpack.c.b16 %v1229, %v1228
      %v1254 = vpack.c.b16 %v1231, %v1230
      %v1255 = vpack.c.b16 %v1233, %v1232
      %v1256 = vpack.c.b16 %v1235, %v1234
      %v1257 = vpack.c.b16 %v1237, %v1236
      %v1258 = vpack.c.b16 %v1239, %v1238
      %v1259 = vpack.c.b16 %v1241, %v1240
      %v1260 = vpack.c.b16 %v1243, %v1242
      %v1261 = vpack.c.b16 %v1245, %v1244
      %v1262 = vpack.c.b16 %v1247, %v1246
      %v1264 = vsel %vm441, %v1248, 0
      %v1267 = vsel %vm441, %v1249, 0
      %v1270 = vsel %vm441, %v1250, 0
      %v1273 = vsel %vm441, %v1251, 0
      %v1276 = vsel %vm441, %v1252, 0
      %v1279 = vsel %vm441, %v1253, 0
      %v1282 = vsel %vm441, %v1254, 0
      %v1285 = vsel %vm441, %v1255, 0
      %v1288 = vsel %vm441, %v1256, 0
      %v1291 = vsel %vm441, %v1257, 0
      %v1294 = vsel %vm441, %v1258, 0
      %v1297 = vsel %vm441, %v1259, 0
      %v1300 = vsel %vm441, %v1260, 0
      %v1303 = vsel %vm441, %v1261, 0
      %v1306 = vsel %vm441, %v1262, 0
      %1308 = vmatprep.subr.bf16.mxu0 0
      %1309 = vmatpush1.bf16.msra.mxu0 %v1145
      %1310 = vmatprep.subr.bf16.mxu0 0
      %1311 = vmatpush1.bf16.msra.mxu0 %v1156
      %1312 = vmatprep.subr.bf16.mxu0 0
      %1313 = vmatpush1.bf16.msra.mxu0 0
      %1314 = vmatprep.subr.bf16.mxu0 0
      %1315 = vmatpush1.bf16.msra.mxu0 0
      %1316 = vmatprep.subr.bf16.mxu0 0
      %1317 = vmatpush1.bf16.msra.mxu0 0
      %1318 = vmatprep.subr.bf16.mxu0 0
      %1319 = vmatpush1.bf16.msra.mxu0 0
      %1320 = vmatprep.subr.bf16.mxu0 0
      %1321 = vmatpush1.bf16.msra.mxu0 0
      %1322 = vmatprep.subr.bf16.mxu0 0
      %1323 = vmatpush1.bf16.msra.mxu0 0
      %1324 = vmatprep.subr.bf16.mxu0 0
      %1325 = vmatpush1.bf16.msra.mxu0 0
      %1326 = vmatprep.subr.bf16.mxu0 0
      %1327 = vmatpush1.bf16.msra.mxu0 0
      %1328 = vmatprep.subr.bf16.mxu0 0
      %1329 = vmatpush1.bf16.msra.mxu0 0
      %1330 = vmatprep.subr.bf16.mxu0 0
      %1331 = vmatpush1.bf16.msra.mxu0 0
      %1332 = vmatprep.subr.bf16.mxu0 0
      %1333 = vmatpush1.bf16.msra.mxu0 0
      %1334 = vmatprep.subr.bf16.mxu0 0
      %1335 = vmatpush1.bf16.msra.mxu0 0
      %1336 = vmatprep.subr.bf16.mxu0 0
      %1337 = vmatpush1.bf16.msra.mxu0 0
      %1338 = vmatprep.subr.bf16.mxu0 0
      %1339 = vmatpush1.bf16.msra.mxu0 0
      %1340 = vmatprep.mubr.bf16.mxu0 0
      %1341 = vmatmul.mubr.bf16.gmra.mrb[0].mxu0 %v1264
      %v1342 = vpop.f32.mrb[0].mxu0
      %v1343 = vadd.f32 0.0, %v1342
      %v1344 = vpop.f32.mrb[0].mxu0
      %v1345 = vpop.f32.mrb[0].mxu0
      %v1346 = vadd.f32 0.0, %v1345
      %v1347 = vpop.f32.mrb[0].mxu0
      %1348 = vmatprep.mubr.bf16.mxu0 0
      %1349 = vmatmul.mubr.bf16.gmra.mrb[0].mxu0 %v1267
      %v1350 = vpop.f32.mrb[0].mxu0
      %v1351 = vadd.f32 0.0, %v1350
      %v1352 = vpop.f32.mrb[0].mxu0
      %v1353 = vpop.f32.mrb[0].mxu0
      %v1354 = vadd.f32 0.0, %v1353
      %v1355 = vpop.f32.mrb[0].mxu0
      %1356 = vmatprep.mubr.bf16.mxu0 0
      %1357 = vmatmul.mubr.bf16.gmra.mrb[0].mxu0 %v1270
      %v1358 = vpop.f32.mrb[0].mxu0
      %v1359 = vadd.f32 0.0, %v1358
      %v1360 = vpop.f32.mrb[0].mxu0
      %v1361 = vpop.f32.mrb[0].mxu0
      %v1362 = vadd.f32 0.0, %v1361
      %v1363 = vpop.f32.mrb[0].mxu0
      %1364 = vmatprep.mubr.bf16.mxu0 0
      %1365 = vmatmul.mubr.bf16.gmra.mrb[0].mxu0 %v1273
      %v1366 = vpop.f32.mrb[0].mxu0
      %v1367 = vadd.f32 0.0, %v1366
      %v1368 = vpop.f32.mrb[0].mxu0
      %v1369 = vpop.f32.mrb[0].mxu0
      %v1370 = vadd.f32 0.0, %v1369
      %v1371 = vpop.f32.mrb[0].mxu0
      %1372 = vmatprep.mubr.bf16.mxu0 0
      %1373 = vmatmul.mubr.bf16.gmra.mrb[0].mxu0 %v1276
      %v1374 = vpop.f32.mrb[0].mxu0
      %v1375 = vadd.f32 0.0, %v1374
      %v1376 = vpop.f32.mrb[0].mxu0
      %v1377 = vpop.f32.mrb[0].mxu0
      %v1378 = vadd.f32 0.0, %v1377
      %v1379 = vpop.f32.mrb[0].mxu0
      %1380 = vmatprep.mubr.bf16.mxu0 0
      %1381 = vmatmul.mubr.bf16.gmra.mrb[0].mxu0 %v1279
      %v1382 = vpop.f32.mrb[0].mxu0
      %v1383 = vadd.f32 0.0, %v1382
      %v1384 = vpop.f32.mrb[0].mxu0
      %v1385 = vpop.f32.mrb[0].mxu0
      %v1386 = vadd.f32 0.0, %v1385
      %v1387 = vpop.f32.mrb[0].mxu0
      %1388 = vmatprep.mubr.bf16.mxu0 0
      %1389 = vmatmul.mubr.bf16.gmra.mrb[0].mxu0 %v1282
      %v1390 = vpop.f32.mrb[0].mxu0
      %v1391 = vadd.f32 0.0, %v1390
      %v1392 = vpop.f32.mrb[0].mxu0
      %v1393 = vpop.f32.mrb[0].mxu0
      %v1394 = vadd.f32 0.0, %v1393
      %v1395 = vpop.f32.mrb[0].mxu0
      %1396 = vmatprep.mubr.bf16.mxu0 0
      %1397 = vmatmul.mubr.bf16.gmra.mrb[0].mxu0 %v1285
      %v1398 = vpop.f32.mrb[0].mxu0
      %v1399 = vadd.f32 0.0, %v1398
      %v1400 = vpop.f32.mrb[0].mxu0
      %v1401 = vpop.f32.mrb[0].mxu0
      %v1402 = vadd.f32 0.0, %v1401
      %v1403 = vpop.f32.mrb[0].mxu0
      %1404 = vmatprep.mubr.bf16.mxu0 0
      %1405 = vmatmul.mubr.bf16.gmra.mrb[0].mxu0 %v1288
      %v1406 = vpop.f32.mrb[0].mxu0
      %v1407 = vadd.f32 0.0, %v1406
      %v1408 = vpop.f32.mrb[0].mxu0
      %v1409 = vpop.f32.mrb[0].mxu0
      %v1410 = vadd.f32 0.0, %v1409
      %v1411 = vpop.f32.mrb[0].mxu0
      %1412 = vmatprep.mubr.bf16.mxu0 0
      %1413 = vmatmul.mubr.bf16.gmra.mrb[0].mxu0 %v1291
      %v1414 = vpop.f32.mrb[0].mxu0
      %v1415 = vadd.f32 0.0, %v1414
      %v1416 = vpop.f32.mrb[0].mxu0
      %v1417 = vpop.f32.mrb[0].mxu0
      %v1418 = vadd.f32 0.0, %v1417
      %v1419 = vpop.f32.mrb[0].mxu0
      %1420 = vmatprep.mubr.bf16.mxu0 0
      %1421 = vmatmul.mubr.bf16.gmra.mrb[0].mxu0 %v1294
      %v1422 = vpop.f32.mrb[0].mxu0
      %v1423 = vadd.f32 0.0, %v1422
      %v1424 = vpop.f32.mrb[0].mxu0
      %v1425 = vpop.f32.mrb[0].mxu0
      %v1426 = vadd.f32 0.0, %v1425
      %v1427 = vpop.f32.mrb[0].mxu0
      %1428 = vmatprep.mubr.bf16.mxu0 0
      %1429 = vmatmul.mubr.bf16.gmra.mrb[0].mxu0 %v1297
      %v1430 = vpop.f32.mrb[0].mxu0
      %v1431 = vadd.f32 0.0, %v1430
      %v1432 = vpop.f32.mrb[0].mxu0
      %v1433 = vpop.f32.mrb[0].mxu0
      %v1434 = vadd.f32 0.0, %v1433
      %v1435 = vpop.f32.mrb[0].mxu0
      %1436 = vmatprep.mubr.bf16.mxu0 0
      %1437 = vmatmul.mubr.bf16.gmra.mrb[0].mxu0 %v1300
      %v1438 = vpop.f32.mrb[0].mxu0
      %v1439 = vadd.f32 0.0, %v1438
      %v1440 = vpop.f32.mrb[0].mxu0
      %v1441 = vpop.f32.mrb[0].mxu0
      %v1442 = vadd.f32 0.0, %v1441
      %v1443 = vpop.f32.mrb[0].mxu0
      %1444 = vmatprep.mubr.bf16.mxu0 0
      %1445 = vmatmul.mubr.bf16.gmra.mrb[0].mxu0 %v1303
      %v1446 = vpop.f32.mrb[0].mxu0
      %v1447 = vadd.f32 0.0, %v1446
      %v1448 = vpop.f32.mrb[0].mxu0
      %v1449 = vpop.f32.mrb[0].mxu0
      %v1450 = vadd.f32 0.0, %v1449
      %v1451 = vpop.f32.mrb[0].mxu0
      %1452 = vmatprep.mubr.bf16.mxu0 0
      %1453 = vmatmul.mubr.bf16.gmra.mrb[0].mxu0 %v1306
      %v1454 = vpop.f32.mrb[0].mxu0
      %v1455 = vadd.f32 0.0, %v1454
      %v1456 = vpop.f32.mrb[0].mxu0
      %v1457 = vpop.f32.mrb[0].mxu0
      %v1458 = vadd.f32 0.0, %v1457
      %v1459 = vpop.f32.mrb[0].mxu0
      %1460 = vdwg.mxu0
      %v1461 = vld [vmem:[%s1 + $0xa8] sm:$0x1]
      %v1462 = vunpack.c.l.bf16 %v1461
      %v1463 = vlaneseq
      %v1464 = vshrl.u32 %v1463, 7
      %v1465 = vsub.s32 0, %v1464
      %v1466 = vrot.slane %v1462, %v1465
      %v1467 = vadd.f32 %v1343, %v1466
      %v1468 = vadd.f32 %v1346, %v1466
      %v1469 = vadd.f32 %v1351, %v1466
      %v1470 = vadd.f32 %v1354, %v1466
      %v1471 = vadd.f32 %v1359, %v1466
      %v1472 = vadd.f32 %v1362, %v1466
      %v1473 = vadd.f32 %v1367, %v1466
      %v1474 = vadd.f32 %v1370, %v1466
      %v1475 = vadd.f32 %v1375, %v1466
      %v1476 = vadd.f32 %v1378, %v1466
      %v1477 = vadd.f32 %v1383, %v1466
      %v1478 = vadd.f32 %v1386, %v1466
      %v1479 = vadd.f32 %v1391, %v1466
      %v1480 = vadd.f32 %v1394, %v1466
      %v1481 = vadd.f32 %v1399, %v1466
      %v1482 = vadd.f32 %v1402, %v1466
      %v1483 = vadd.f32 %v1407, %v1466
      %v1484 = vadd.f32 %v1410, %v1466
      %v1485 = vadd.f32 %v1415, %v1466
      %v1486 = vadd.f32 %v1418, %v1466
      %v1487 = vadd.f32 %v1423, %v1466
      %v1488 = vadd.f32 %v1426, %v1466
      %v1489 = vadd.f32 %v1431, %v1466
      %v1490 = vadd.f32 %v1434, %v1466
      %v1491 = vadd.f32 %v1439, %v1466
      %v1492 = vadd.f32 %v1442, %v1466
      %v1493 = vadd.f32 %v1447, %v1466
      %v1494 = vadd.f32 %v1450, %v1466
      %v1495 = vadd.f32 %v1455, %v1466
      %v1496 = vadd.f32 %v1458, %v1466
      %v1497 = vmax.f32 %v1467, 0.0
      %v1498 = vmax.f32 %v1468, 0.0
      %v1499 = vmax.f32 %v1469, 0.0
      %v1500 = vmax.f32 %v1470, 0.0
      %v1501 = vmax.f32 %v1471, 0.0
      %v1502 = vmax.f32 %v1472, 0.0
      %v1503 = vmax.f32 %v1473, 0.0
      %v1504 = vmax.f32 %v1474, 0.0
      %v1505 = vmax.f32 %v1475, 0.0
      %v1506 = vmax.f32 %v1476, 0.0
      %v1507 = vmax.f32 %v1477, 0.0
      %v1508 = vmax.f32 %v1478, 0.0
      %v1509 = vmax.f32 %v1479, 0.0
      %v1510 = vmax.f32 %v1480, 0.0
      %v1511 = vmax.f32 %v1481, 0.0
      %v1512 = vmax.f32 %v1482, 0.0
      %v1513 = vmax.f32 %v1483, 0.0
      %v1514 = vmax.f32 %v1484, 0.0
      %v1515 = vmax.f32 %v1485, 0.0
      %v1516 = vmax.f32 %v1486, 0.0
      %v1517 = vmax.f32 %v1487, 0.0
      %v1518 = vmax.f32 %v1488, 0.0
      %v1519 = vmax.f32 %v1489, 0.0
      %v1520 = vmax.f32 %v1490, 0.0
      %v1521 = vmax.f32 %v1491, 0.0
      %v1522 = vmax.f32 %v1492, 0.0
      %v1523 = vmax.f32 %v1493, 0.0
      %v1524 = vmax.f32 %v1494, 0.0
      %v1525 = vmax.f32 %v1495, 0.0
      %v1526 = vmax.f32 %v1496, 0.0
      %v1527 = vpack.c.bf16 %v1498, %v1497
      %v1528 = vpack.c.bf16 %v1500, %v1499
      %v1529 = vpack.c.bf16 %v1502, %v1501
      %v1530 = vpack.c.bf16 %v1504, %v1503
      %v1531 = vpack.c.bf16 %v1506, %v1505
      %v1532 = vpack.c.bf16 %v1508, %v1507
      %v1533 = vpack.c.bf16 %v1510, %v1509
      %v1534 = vpack.c.bf16 %v1512, %v1511
      %v1535 = vpack.c.bf16 %v1514, %v1513
      %v1536 = vpack.c.bf16 %v1516, %v1515
      %v1537 = vpack.c.bf16 %v1518, %v1517
      %v1538 = vpack.c.bf16 %v1520, %v1519
      %v1539 = vpack.c.bf16 %v1522, %v1521
      %v1540 = vpack.c.bf16 %v1524, %v1523
      %v1541 = vpack.c.bf16 %v1526, %v1525
      %v1542 = vld [vmem:[%s1 + $0x90] sm:$0xf]
      %v1543 = vld [vmem:[%s1 + $0x94] sm:$0xf]
      %v1544 = vld [vmem:[%s1 + $0x98] sm:$0xf]
      %v1545 = vld [vmem:[%s1 + $0x9c] sm:$0xf]
      %v1546 = vld [vmem:[%s1 + $0x80] sm:$0x1]
      %v1547 = vunpack.c.l.bf16 %v1546
      %v1548 = vlaneseq
      %v1549 = vshrl.u32 %v1548, 7
      %v1550 = vsub.s32 0, %v1549
      %v1551 = vrot.slane %v1547, %v1550
      %v1556 = vunpack.c.l.b16 %v1542
      %v1557 = vunpack.c.l.b16 %v1543
      %v1558 = vunpack.c.l.b16 %v1544
      %v1559 = vunpack.c.l.b16 %v1545
      %v1560 = vpack.c.b16 %v1557, %v1556
      %v1561 = vpack.c.b16 %v1559, %v1558
      %1562 = vrot.lane.b32.xlu0 %v1560, 64
      %v1563 = vpop.permute.xlu0 %1562
      %1564 = vrot.lane.b32.xlu0 %v1561, 64
      %v1565 = vpop.permute.xlu0 %1564
      %1569 = vrot.lane.b32.xlu0 %v1551, 16
      %v1570 = vpop.permute.xlu0 %1569
      %v1573 = vsel %vm441, %v1527, 0
      %v1576 = vsel %vm441, %v1528, 0
      %v1579 = vsel %vm441, %v1529, 0
      %v1582 = vsel %vm441, %v1530, 0
      %v1585 = vsel %vm441, %v1531, 0
      %v1588 = vsel %vm441, %v1532, 0
      %v1591 = vsel %vm441, %v1533, 0
      %v1594 = vsel %vm441, %v1534, 0
      %v1597 = vsel %vm441, %v1535, 0
      %v1600 = vsel %vm441, %v1536, 0
      %v1603 = vsel %vm441, %v1537, 0
      %v1606 = vsel %vm441, %v1538, 0
      %v1609 = vsel %vm441, %v1539, 0
      %v1612 = vsel %vm441, %v1540, 0
      %v1615 = vsel %vm441, %v1541, 0
      %1617 = vmatprep.subr.bf16.mxu0 0
      %1618 = vmatpush1.bf16.msra.mxu0 %v1563
      %1619 = vmatprep.subr.bf16.mxu0 0
      %1620 = vmatpush1.bf16.msra.mxu0 %v1565
      %1621 = vmatprep.subr.bf16.mxu0 0
      %1622 = vmatpush1.bf16.msra.mxu0 0
      %1623 = vmatprep.subr.bf16.mxu0 0
      %1624 = vmatpush1.bf16.msra.mxu0 0
      %1625 = vmatprep.subr.bf16.mxu0 0
      %1626 = vmatpush1.bf16.msra.mxu0 0
      %1627 = vmatprep.subr.bf16.mxu0 0
      %1628 = vmatpush1.bf16.msra.mxu0 0
      %1629 = vmatprep.subr.bf16.mxu0 0
      %1630 = vmatpush1.bf16.msra.mxu0 0
      %1631 = vmatprep.subr.bf16.mxu0 0
      %1632 = vmatpush1.bf16.msra.mxu0 0
      %1633 = vmatprep.subr.bf16.mxu0 0
      %1634 = vmatpush1.bf16.msra.mxu0 0
      %1635 = vmatprep.subr.bf16.mxu0 0
      %1636 = vmatpush1.bf16.msra.mxu0 0
      %1637 = vmatprep.subr.bf16.mxu0 0
      %1638 = vmatpush1.bf16.msra.mxu0 0
      %1639 = vmatprep.subr.bf16.mxu0 0
      %1640 = vmatpush1.bf16.msra.mxu0 0
      %1641 = vmatprep.subr.bf16.mxu0 0
      %1642 = vmatpush1.bf16.msra.mxu0 0
      %1643 = vmatprep.subr.bf16.mxu0 0
      %1644 = vmatpush1.bf16.msra.mxu0 0
      %1645 = vmatprep.subr.bf16.mxu0 0
      %1646 = vmatpush1.bf16.msra.mxu0 0
      %1647 = vmatprep.subr.bf16.mxu0 0
      %1648 = vmatpush1.bf16.msra.mxu0 0
      %1649 = vmatprep.mubr.bf16.mxu0 0
      %1650 = vmatmul.mubr.bf16.gmra.mrb[0].mxu0 %v1573
      %v1651 = vpop.f32.mrb[0].mxu0
      %v1652 = vadd.f32 %v1570, %v1651
      %v1653 = vpop.f32.mrb[0].mxu0
      %v1654 = vpop.f32.mrb[0].mxu0
      %v1655 = vadd.f32 %v1570, %v1654
      %v1656 = vpop.f32.mrb[0].mxu0
      %1657 = vmatprep.mubr.bf16.mxu0 0
      %1658 = vmatmul.mubr.bf16.gmra.mrb[0].mxu0 %v1576
      %v1659 = vpop.f32.mrb[0].mxu0
      %v1660 = vadd.f32 %v1570, %v1659
      %v1661 = vpop.f32.mrb[0].mxu0
      %v1662 = vpop.f32.mrb[0].mxu0
      %v1663 = vadd.f32 %v1570, %v1662
      %v1664 = vpop.f32.mrb[0].mxu0
      %1665 = vmatprep.mubr.bf16.mxu0 0
      %1666 = vmatmul.mubr.bf16.gmra.mrb[0].mxu0 %v1579
      %v1667 = vpop.f32.mrb[0].mxu0
      %v1668 = vadd.f32 %v1570, %v1667
      %v1669 = vpop.f32.mrb[0].mxu0
      %v1670 = vpop.f32.mrb[0].mxu0
      %v1671 = vadd.f32 %v1570, %v1670
      %v1672 = vpop.f32.mrb[0].mxu0
      %1673 = vmatprep.mubr.bf16.mxu0 0
      %1674 = vmatmul.mubr.bf16.gmra.mrb[0].mxu0 %v1582
      %v1675 = vpop.f32.mrb[0].mxu0
      %v1676 = vadd.f32 %v1570, %v1675
      %v1677 = vpop.f32.mrb[0].mxu0
      %v1678 = vpop.f32.mrb[0].mxu0
      %v1679 = vadd.f32 %v1570, %v1678
      %v1680 = vpop.f32.mrb[0].mxu0
      %1681 = vmatprep.mubr.bf16.mxu0 0
      %1682 = vmatmul.mubr.bf16.gmra.mrb[0].mxu0 %v1585
      %v1683 = vpop.f32.mrb[0].mxu0
      %v1684 = vadd.f32 %v1570, %v1683
      %v1685 = vpop.f32.mrb[0].mxu0
      %v1686 = vpop.f32.mrb[0].mxu0
      %v1687 = vadd.f32 %v1570, %v1686
      %v1688 = vpop.f32.mrb[0].mxu0
      %1689 = vmatprep.mubr.bf16.mxu0 0
      %1690 = vmatmul.mubr.bf16.gmra.mrb[0].mxu0 %v1588
      %v1691 = vpop.f32.mrb[0].mxu0
      %v1692 = vadd.f32 %v1570, %v1691
      %v1693 = vpop.f32.mrb[0].mxu0
      %v1694 = vpop.f32.mrb[0].mxu0
      %v1695 = vadd.f32 %v1570, %v1694
      %v1696 = vpop.f32.mrb[0].mxu0
      %1697 = vmatprep.mubr.bf16.mxu0 0
      %1698 = vmatmul.mubr.bf16.gmra.mrb[0].mxu0 %v1591
      %v1699 = vpop.f32.mrb[0].mxu0
      %v1700 = vadd.f32 %v1570, %v1699
      %v1701 = vpop.f32.mrb[0].mxu0
      %v1702 = vpop.f32.mrb[0].mxu0
      %v1703 = vadd.f32 %v1570, %v1702
      %v1704 = vpop.f32.mrb[0].mxu0
      %1705 = vmatprep.mubr.bf16.mxu0 0
      %1706 = vmatmul.mubr.bf16.gmra.mrb[0].mxu0 %v1594
      %v1707 = vpop.f32.mrb[0].mxu0
      %v1708 = vadd.f32 %v1570, %v1707
      %v1709 = vpop.f32.mrb[0].mxu0
      %v1710 = vpop.f32.mrb[0].mxu0
      %v1711 = vadd.f32 %v1570, %v1710
      %v1712 = vpop.f32.mrb[0].mxu0
      %1713 = vmatprep.mubr.bf16.mxu0 0
      %1714 = vmatmul.mubr.bf16.gmra.mrb[0].mxu0 %v1597
      %v1715 = vpop.f32.mrb[0].mxu0
      %v1716 = vadd.f32 %v1570, %v1715
      %v1717 = vpop.f32.mrb[0].mxu0
      %v1718 = vpop.f32.mrb[0].mxu0
      %v1719 = vadd.f32 %v1570, %v1718
      %v1720 = vpop.f32.mrb[0].mxu0
      %1721 = vmatprep.mubr.bf16.mxu0 0
      %1722 = vmatmul.mubr.bf16.gmra.mrb[0].mxu0 %v1600
      %v1723 = vpop.f32.mrb[0].mxu0
      %v1724 = vadd.f32 %v1570, %v1723
      %v1725 = vpop.f32.mrb[0].mxu0
      %v1726 = vpop.f32.mrb[0].mxu0
      %v1727 = vadd.f32 %v1570, %v1726
      %v1728 = vpop.f32.mrb[0].mxu0
      %1729 = vmatprep.mubr.bf16.mxu0 0
      %1730 = vmatmul.mubr.bf16.gmra.mrb[0].mxu0 %v1603
      %v1731 = vpop.f32.mrb[0].mxu0
      %v1732 = vadd.f32 %v1570, %v1731
      %v1733 = vpop.f32.mrb[0].mxu0
      %v1734 = vpop.f32.mrb[0].mxu0
      %v1735 = vadd.f32 %v1570, %v1734
      %v1736 = vpop.f32.mrb[0].mxu0
      %1737 = vmatprep.mubr.bf16.mxu0 0
      %1738 = vmatmul.mubr.bf16.gmra.mrb[0].mxu0 %v1606
      %v1739 = vpop.f32.mrb[0].mxu0
      %v1740 = vadd.f32 %v1570, %v1739
      %v1741 = vpop.f32.mrb[0].mxu0
      %v1742 = vpop.f32.mrb[0].mxu0
      %v1743 = vadd.f32 %v1570, %v1742
      %v1744 = vpop.f32.mrb[0].mxu0
      %1745 = vmatprep.mubr.bf16.mxu0 0
      %1746 = vmatmul.mubr.bf16.gmra.mrb[0].mxu0 %v1609
      %v1747 = vpop.f32.mrb[0].mxu0
      %v1748 = vadd.f32 %v1570, %v1747
      %v1749 = vpop.f32.mrb[0].mxu0
      %v1750 = vpop.f32.mrb[0].mxu0
      %v1751 = vadd.f32 %v1570, %v1750
      %v1752 = vpop.f32.mrb[0].mxu0
      %1753 = vmatprep.mubr.bf16.mxu0 0
      %1754 = vmatmul.mubr.bf16.gmra.mrb[0].mxu0 %v1612
      %v1755 = vpop.f32.mrb[0].mxu0
      %v1756 = vadd.f32 %v1570, %v1755
      %v1757 = vpop.f32.mrb[0].mxu0
      %v1758 = vpop.f32.mrb[0].mxu0
      %v1759 = vadd.f32 %v1570, %v1758
      %v1760 = vpop.f32.mrb[0].mxu0
      %1761 = vmatprep.mubr.bf16.mxu0 0
      %1762 = vmatmul.mubr.bf16.gmra.mrb[0].mxu0 %v1615
      %v1763 = vpop.f32.mrb[0].mxu0
      %v1764 = vadd.f32 %v1570, %v1763
      %v1765 = vpop.f32.mrb[0].mxu0
      %v1766 = vpop.f32.mrb[0].mxu0
      %v1767 = vadd.f32 %v1570, %v1766
      %v1768 = vpop.f32.mrb[0].mxu0
      %1769 = vdwg.mxu0
      %1800 = vrot.lane.b32.xlu0 %v1343, 98
      %v1801 = vpop.permute.xlu0 %1800
      %1802 = vrot.lane.b32.xlu0 %v1346, 98
      %v1803 = vpop.permute.xlu0 %1802
      %1804 = vrot.lane.b32.xlu0 %v1351, 98
      %v1805 = vpop.permute.xlu0 %1804
      %1806 = vrot.lane.b32.xlu0 %v1354, 98
      %v1807 = vpop.permute.xlu0 %1806
      %1808 = vrot.lane.b32.xlu0 %v1359, 98
      %v1809 = vpop.permute.xlu0 %1808
      %1810 = vrot.lane.b32.xlu0 %v1362, 98
      %v1811 = vpop.permute.xlu0 %1810
      %1812 = vrot.lane.b32.xlu0 %v1367, 98
      %v1813 = vpop.permute.xlu0 %1812
      %1814 = vrot.lane.b32.xlu0 %v1370, 98
      %v1815 = vpop.permute.xlu0 %1814
      %1816 = vrot.lane.b32.xlu0 %v1375, 98
      %v1817 = vpop.permute.xlu0 %1816
      %1818 = vrot.lane.b32.xlu0 %v1378, 98
      %v1819 = vpop.permute.xlu0 %1818
      %1820 = vrot.lane.b32.xlu0 %v1383, 98
      %v1821 = vpop.permute.xlu0 %1820
      %1822 = vrot.lane.b32.xlu0 %v1386, 98
      %v1823 = vpop.permute.xlu0 %1822
      %1824 = vrot.lane.b32.xlu0 %v1391, 98
      %v1825 = vpop.permute.xlu0 %1824
      %1826 = vrot.lane.b32.xlu0 %v1394, 98
      %v1827 = vpop.permute.xlu0 %1826
      %1828 = vrot.lane.b32.xlu0 %v1399, 98
      %v1829 = vpop.permute.xlu0 %1828
      %1830 = vrot.lane.b32.xlu0 %v1402, 98
      %v1831 = vpop.permute.xlu0 %1830
      %1832 = vrot.lane.b32.xlu0 %v1407, 98
      %v1833 = vpop.permute.xlu0 %1832
      %1834 = vrot.lane.b32.xlu0 %v1410, 98
      %v1835 = vpop.permute.xlu0 %1834
      %1836 = vrot.lane.b32.xlu0 %v1415, 98
      %v1837 = vpop.permute.xlu0 %1836
      %1838 = vrot.lane.b32.xlu0 %v1418, 98
      %v1839 = vpop.permute.xlu0 %1838
      %1840 = vrot.lane.b32.xlu0 %v1423, 98
      %v1841 = vpop.permute.xlu0 %1840
      %1842 = vrot.lane.b32.xlu0 %v1426, 98
      %v1843 = vpop.permute.xlu0 %1842
      %1844 = vrot.lane.b32.xlu0 %v1431, 98
      %v1845 = vpop.permute.xlu0 %1844
      %1846 = vrot.lane.b32.xlu0 %v1434, 98
      %v1847 = vpop.permute.xlu0 %1846
      %1848 = vrot.lane.b32.xlu0 %v1439, 98
      %v1849 = vpop.permute.xlu0 %1848
      %1850 = vrot.lane.b32.xlu0 %v1442, 98
      %v1851 = vpop.permute.xlu0 %1850
      %1852 = vrot.lane.b32.xlu0 %v1447, 98
      %v1853 = vpop.permute.xlu0 %1852
      %1854 = vrot.lane.b32.xlu0 %v1450, 98
      %v1855 = vpop.permute.xlu0 %1854
      %1856 = vrot.lane.b32.xlu0 %v1455, 98
      %v1857 = vpop.permute.xlu0 %1856
      %1858 = vrot.lane.b32.xlu0 %v1458, 98
      %v1859 = vpop.permute.xlu0 %1858
      %vm1890 = vcmask 15360
      %v1891 = vsel %vm1890, %v1652, %v1801
      %v1892 = vsel %vm1890, %v1655, %v1803
      %v1893 = vsel %vm1890, %v1660, %v1805
      %v1894 = vsel %vm1890, %v1663, %v1807
      %v1895 = vsel %vm1890, %v1668, %v1809
      %v1896 = vsel %vm1890, %v1671, %v1811
      %v1897 = vsel %vm1890, %v1676, %v1813
      %v1898 = vsel %vm1890, %v1679, %v1815
      %v1899 = vsel %vm1890, %v1684, %v1817
      %v1900 = vsel %vm1890, %v1687, %v1819
      %v1901 = vsel %vm1890, %v1692, %v1821
      %v1902 = vsel %vm1890, %v1695, %v1823
      %v1903 = vsel %vm1890, %v1700, %v1825
      %v1904 = vsel %vm1890, %v1703, %v1827
      %v1905 = vsel %vm1890, %v1708, %v1829
      %v1906 = vsel %vm1890, %v1711, %v1831
      %v1907 = vsel %vm1890, %v1716, %v1833
      %v1908 = vsel %vm1890, %v1719, %v1835
      %v1909 = vsel %vm1890, %v1724, %v1837
      %v1910 = vsel %vm1890, %v1727, %v1839
      %v1911 = vsel %vm1890, %v1732, %v1841
      %v1912 = vsel %vm1890, %v1735, %v1843
      %v1913 = vsel %vm1890, %v1740, %v1845
      %v1914 = vsel %vm1890, %v1743, %v1847
      %v1915 = vsel %vm1890, %v1748, %v1849
      %v1916 = vsel %vm1890, %v1751, %v1851
      %v1917 = vsel %vm1890, %v1756, %v1853
      %v1918 = vsel %vm1890, %v1759, %v1855
      %v1919 = vsel %vm1890, %v1764, %v1857
      %v1920 = vsel %vm1890, %v1767, %v1859
      %vm1921 = vcmask 195584
      %1922 = vst.msk [vmem:[%s226] sm:$0xff] %vm1921, %v1891
      %1923 = vst.msk [vmem:[%s226 + $0x8] sm:$0xff] %vm1921, %v1892
      %1924 = vst.msk [vmem:[%s226 + $0x10] sm:$0xff] %vm1921, %v1893
      %1925 = vst.msk [vmem:[%s226 + $0x18] sm:$0xff] %vm1921, %v1894
      %1926 = vst.msk [vmem:[%s226 + $0x20] sm:$0xff] %vm1921, %v1895
      %1927 = vst.msk [vmem:[%s226 + $0x28] sm:$0xff] %vm1921, %v1896
      %1928 = vst.msk [vmem:[%s226 + $0x30] sm:$0xff] %vm1921, %v1897
      %1929 = vst.msk [vmem:[%s226 + $0x38] sm:$0xff] %vm1921, %v1898
      %1930 = vst.msk [vmem:[%s226 + $0x40] sm:$0xff] %vm1921, %v1899
      %1931 = vst.msk [vmem:[%s226 + $0x48] sm:$0xff] %vm1921, %v1900
      %1932 = vst.msk [vmem:[%s226 + $0x50] sm:$0xff] %vm1921, %v1901
      %1933 = vst.msk [vmem:[%s226 + $0x58] sm:$0xff] %vm1921, %v1902
      %1934 = vst.msk [vmem:[%s226 + $0x60] sm:$0xff] %vm1921, %v1903
      %1935 = vst.msk [vmem:[%s226 + $0x68] sm:$0xff] %vm1921, %v1904
      %1936 = vst.msk [vmem:[%s226 + $0x70] sm:$0xff] %vm1921, %v1905
      %1937 = vst.msk [vmem:[%s226 + $0x78] sm:$0xff] %vm1921, %v1906
      %1938 = vst.msk [vmem:[%s226 + $0x80] sm:$0xff] %vm1921, %v1907
      %1939 = vst.msk [vmem:[%s226 + $0x88] sm:$0xff] %vm1921, %v1908
      %1940 = vst.msk [vmem:[%s226 + $0x90] sm:$0xff] %vm1921, %v1909
      %1941 = vst.msk [vmem:[%s226 + $0x98] sm:$0xff] %vm1921, %v1910
      %1942 = vst.msk [vmem:[%s226 + $0xa0] sm:$0xff] %vm1921, %v1911
      %1943 = vst.msk [vmem:[%s226 + $0xa8] sm:$0xff] %vm1921, %v1912
      %1944 = vst.msk [vmem:[%s226 + $0xb0] sm:$0xff] %vm1921, %v1913
      %1945 = vst.msk [vmem:[%s226 + $0xb8] sm:$0xff] %vm1921, %v1914
      %1946 = vst.msk [vmem:[%s226 + $0xc0] sm:$0xff] %vm1921, %v1915
      %1947 = vst.msk [vmem:[%s226 + $0xc8] sm:$0xff] %vm1921, %v1916
      %1948 = vst.msk [vmem:[%s226 + $0xd0] sm:$0xff] %vm1921, %v1917
      %1949 = vst.msk [vmem:[%s226 + $0xd8] sm:$0xff] %vm1921, %v1918
      %1950 = vst.msk [vmem:[%s226 + $0xe0] sm:$0xff] %vm1921, %v1919
      %1951 = vst.msk [vmem:[%s226 + $0xe8] sm:$0xff] %vm1921, %v1920
      %v1952 = vld [vmem:[%s1 + $0x78] sm:$0xf]
      %v1953 = vld [vmem:[%s1 + $0x7c] sm:$0xf]
      %v1954 = vld [vmem:[%s1 + $0x80] sm:$0xf]
      %v1955 = vld [vmem:[%s1 + $0x84] sm:$0xf]
      %v1958 = vunpack.c.l.b16 %v1954
      %v1959 = vunpack.c.l.b16 %v1955
      %v1960 = vpack.c.b16 %v1959, %v1958
      %vm1961 = vcmask 916480
      %v1963 = vsel %vm1961, %v1960, 0
      %1965 = vmatprep.subr.bf16.mxu0 0
      %1966 = vmatpush1.bf16.msra.mxu0 %v1535
      %1967 = vmatprep.subr.bf16.mxu0 0
      %1968 = vmatpush1.bf16.msra.mxu0 %v1536
      %1969 = vmatprep.subr.bf16.mxu0 0
      %1970 = vmatpush1.bf16.msra.mxu0 %v1537
      %1971 = vmatprep.subr.bf16.mxu0 0
      %1972 = vmatpush1.bf16.msra.mxu0 %v1538
      %1973 = vmatprep.subr.bf16.mxu0 0
      %1974 = vmatpush1.bf16.msra.mxu0 %v1539
      %1975 = vmatprep.subr.bf16.mxu0 0
      %1976 = vmatpush1.bf16.msra.mxu0 %v1540
      %1977 = vmatprep.subr.bf16.mxu0 0
      %1978 = vmatpush1.bf16.msra.mxu0 %v1541
      %1979 = vmatprep.subr.bf16.mxu0 0
      %1980 = vmatpush1.bf16.msra.mxu0 0
      %1981 = vmatprep.subr.bf16.mxu0 0
      %1982 = vmatpush1.bf16.msra.mxu0 0
      %1983 = vmatprep.subr.bf16.mxu0 0
      %1984 = vmatpush1.bf16.msra.mxu0 0
      %1985 = vmatprep.subr.bf16.mxu0 0
      %1986 = vmatpush1.bf16.msra.mxu0 0
      %1987 = vmatprep.subr.bf16.mxu0 0
      %1988 = vmatpush1.bf16.msra.mxu0 0
      %1989 = vmatprep.subr.bf16.mxu0 0
      %1990 = vmatpush1.bf16.msra.mxu0 0
      %1991 = vmatprep.subr.bf16.mxu0 0
      %1992 = vmatpush1.bf16.msra.mxu0 0
      %1993 = vmatprep.subr.bf16.mxu0 0
      %1994 = vmatpush1.bf16.msra.mxu0 0
      %1995 = vmatprep.subr.bf16.mxu0 0
      %1996 = vmatpush1.bf16.msra.mxu0 0
      %1997 = vmatprep.mubr.bf16.mxu0 0
      %1998 = vmatmul.mubr.bf16.gmra.mrb[0].mxu0 %v1963
      %v1999 = vpop.f32.mrb[0].mxu0
      %v2000 = vadd.f32 0.0, %v1999
      %v2001 = vpop.f32.mrb[0].mxu0
      %v2002 = vpop.f32.mrb[0].mxu0
      %v2003 = vadd.f32 0.0, %v2002
      %v2004 = vpop.f32.mrb[0].mxu0
      %2005 = vdwg.mxu0
      %v2008 = vunpack.c.l.b16 %v1952
      %v2009 = vunpack.c.l.b16 %v1953
      %v2010 = vpack.c.b16 %v2009, %v2008
      %2012 = vmatprep.subr.bf16.mxu0 0
      %2013 = vmatpush1.bf16.msra.mxu0 %v1527
      %2014 = vmatprep.subr.bf16.mxu0 0
      %2015 = vmatpush1.bf16.msra.mxu0 %v1528
      %2016 = vmatprep.subr.bf16.mxu0 0
      %2017 = vmatpush1.bf16.msra.mxu0 %v1529
      %2018 = vmatprep.subr.bf16.mxu0 0
      %2019 = vmatpush1.bf16.msra.mxu0 %v1530
      %2020 = vmatprep.subr.bf16.mxu0 0
      %2021 = vmatpush1.bf16.msra.mxu0 %v1531
      %2022 = vmatprep.subr.bf16.mxu0 0
      %2023 = vmatpush1.bf16.msra.mxu0 %v1532
      %2024 = vmatprep.subr.bf16.mxu0 0
      %2025 = vmatpush1.bf16.msra.mxu0 %v1533
      %2026 = vmatprep.subr.bf16.mxu0 0
      %2027 = vmatpush1.bf16.msra.mxu0 %v1534
      %2028 = vmatprep.subr.bf16.mxu0 0
      %2029 = vmatpush1.bf16.msra.mxu0 0
      %2030 = vmatprep.subr.bf16.mxu0 0
      %2031 = vmatpush1.bf16.msra.mxu0 0
      %2032 = vmatprep.subr.bf16.mxu0 0
      %2033 = vmatpush1.bf16.msra.mxu0 0
      %2034 = vmatprep.subr.bf16.mxu0 0
      %2035 = vmatpush1.bf16.msra.mxu0 0
      %2036 = vmatprep.subr.bf16.mxu0 0
      %2037 = vmatpush1.bf16.msra.mxu0 0
      %2038 = vmatprep.subr.bf16.mxu0 0
      %2039 = vmatpush1.bf16.msra.mxu0 0
      %2040 = vmatprep.subr.bf16.mxu0 0
      %2041 = vmatpush1.bf16.msra.mxu0 0
      %2042 = vmatprep.subr.bf16.mxu0 0
      %2043 = vmatpush1.bf16.msra.mxu0 0
      %2044 = vmatprep.mubr.bf16.mxu0 0
      %2045 = vmatmul.mubr.bf16.gmra.mrb[0].mxu0 %v2010
      %v2046 = vpop.f32.mrb[0].mxu0
      %v2047 = vadd.f32 %v2000, %v2046
      %v2048 = vpop.f32.mrb[0].mxu0
      %v2049 = vpop.f32.mrb[0].mxu0
      %v2050 = vadd.f32 %v2003, %v2049
      %v2051 = vpop.f32.mrb[0].mxu0
      %2052 = vdwg.mxu0
      %v2053 = vpack.c.bf16 %v2050, %v2047
      %2055 = vrot.lane.b32.xlu0 %v2053, 22
      %v2056 = vpop.permute.xlu0 %2055
      %v2058 = vsel %vm1091, %v1074, %v2056
      %v2059 = vld [vmem:[%s1] sm:$0xf]
      %v2060 = vld [vmem:[%s1 + $0x4] sm:$0xf]
      %v2061 = vld [vmem:[%s1 + $0x8] sm:$0xf]
      %v2062 = vld [vmem:[%s1 + $0xc] sm:$0xf]
      %v2063 = vld [vmem:[%s1 + $0x10] sm:$0xf]
      %v2064 = vld [vmem:[%s1 + $0x14] sm:$0xf]
      %v2065 = vld [vmem:[%s1 + $0x18] sm:$0x7]
      %v2066 = vld [vmem:[%s1 + $0xa8] sm:$0x1]
      %v2067 = vunpack.c.l.bf16 %v2066
      %v2068 = vlaneseq
      %v2069 = vshrl.u32 %v2068, 7
      %v2070 = vsub.s32 0, %v2069
      %v2071 = vrot.slane %v2067, %v2070
      %v2079 = vunpack.c.l.b16 %v2059
      %v2080 = vunpack.c.l.b16 %v2060
      %v2081 = vunpack.c.l.b16 %v2061
      %v2082 = vunpack.c.l.b16 %v2062
      %v2083 = vunpack.c.l.b16 %v2063
      %v2084 = vunpack.c.l.b16 %v2064
      %v2085 = vunpack.c.l.b16 %v2065
      %v2086 = vpack.c.b16 %v2080, %v2079
      %v2087 = vpack.c.b16 %v2082, %v2081
      %v2088 = vpack.c.b16 %v2084, %v2083
      %v2089 = vpack.c.b16 %v2085, %v2085
      %2090 = vrot.lane.b32.xlu0 %v2086, 96
      %v2091 = vpop.permute.xlu0 %2090
      %2092 = vrot.lane.b32.xlu0 %v2087, 96
      %v2093 = vpop.permute.xlu0 %2092
      %2094 = vrot.lane.b32.xlu0 %v2088, 96
      %v2095 = vpop.permute.xlu0 %2094
      %2096 = vrot.lane.b32.xlu0 %v2089, 96
      %v2097 = vpop.permute.xlu0 %2096
      %2102 = vrot.lane.b32.xlu0 %v2071, 96
      %v2103 = vpop.permute.xlu0 %2102
      %vm2105 = vcmask 441344
      %v2106 = vsel %vm2105, %v2058, 0
      %v2109 = vsel %vm295, %v2097, 0
      %2111 = vmatprep.subr.bf16.mxu0 0
      %2112 = vmatpush1.bf16.msra.mxu0 %v2091
      %2113 = vmatprep.subr.bf16.mxu0 0
      %2114 = vmatpush1.bf16.msra.mxu0 %v2093
      %2115 = vmatprep.subr.bf16.mxu0 0
      %2116 = vmatpush1.bf16.msra.mxu0 %v2095
      %2117 = vmatprep.subr.bf16.mxu0 0
      %2118 = vmatpush1.bf16.msra.mxu0 %v2109
      %2119 = vmatprep.subr.bf16.mxu0 0
      %2120 = vmatpush1.bf16.msra.mxu0 0
      %2121 = vmatprep.subr.bf16.mxu0 0
      %2122 = vmatpush1.bf16.msra.mxu0 0
      %2123 = vmatprep.subr.bf16.mxu0 0
      %2124 = vmatpush1.bf16.msra.mxu0 0
      %2125 = vmatprep.subr.bf16.mxu0 0
      %2126 = vmatpush1.bf16.msra.mxu0 0
      %2127 = vmatprep.subr.bf16.mxu0 0
      %2128 = vmatpush1.bf16.msra.mxu0 0
      %2129 = vmatprep.subr.bf16.mxu0 0
      %2130 = vmatpush1.bf16.msra.mxu0 0
      %2131 = vmatprep.subr.bf16.mxu0 0
      %2132 = vmatpush1.bf16.msra.mxu0 0
      %2133 = vmatprep.subr.bf16.mxu0 0
      %2134 = vmatpush1.bf16.msra.mxu0 0
      %2135 = vmatprep.subr.bf16.mxu0 0
      %2136 = vmatpush1.bf16.msra.mxu0 0
      %2137 = vmatprep.subr.bf16.mxu0 0
      %2138 = vmatpush1.bf16.msra.mxu0 0
      %2139 = vmatprep.subr.bf16.mxu0 0
      %2140 = vmatpush1.bf16.msra.mxu0 0
      %2141 = vmatprep.subr.bf16.mxu0 0
      %2142 = vmatpush1.bf16.msra.mxu0 0
      %2143 = vmatprep.mubr.bf16.mxu0 0
      %2144 = vmatmul.mubr.bf16.gmra.mrb[0].mxu0 %v2106
      %v2145 = vpop.f32.mrb[0].mxu0
      %v2146 = vadd.f32 %v2103, %v2145
      %v2147 = vpop.f32.mrb[0].mxu0
      %v2148 = vpop.f32.mrb[0].mxu0
      %v2149 = vadd.f32 %v2103, %v2148
      %v2150 = vpop.f32.mrb[0].mxu0
      %2151 = vdwg.mxu0
      %v2152 = vmax.f32 %v2146, 0.0
      %v2153 = vmax.f32 %v2149, 0.0
      %v2154 = vpack.c.bf16 %v2153, %v2152
      %v2155 = vld [vmem:[%s1 + $0x90] sm:$0xf]
      %v2156 = vld [vmem:[%s1 + $0x94] sm:$0xf]
      %v2157 = vld [vmem:[%s1 + $0x98] sm:$0xf]
      %v2158 = vld [vmem:[%s1 + $0x9c] sm:$0xf]
      %v2159 = vld [vmem:[%s1 + $0x80] sm:$0x1]
      %v2160 = vunpack.c.l.bf16 %v2159
      %v2161 = vlaneseq
      %v2162 = vshrl.u32 %v2161, 7
      %v2163 = vsub.s32 0, %v2162
      %v2164 = vrot.slane %v2160, %v2163
      %v2169 = vunpack.c.l.b16 %v2155
      %v2170 = vunpack.c.l.b16 %v2156
      %v2171 = vunpack.c.l.b16 %v2157
      %v2172 = vunpack.c.l.b16 %v2158
      %v2173 = vpack.c.b16 %v2170, %v2169
      %v2174 = vpack.c.b16 %v2172, %v2171
      %2175 = vrot.lane.b32.xlu0 %v2173, 56
      %v2176 = vpop.permute.xlu0 %2175
      %2177 = vrot.lane.b32.xlu0 %v2174, 56
      %v2178 = vpop.permute.xlu0 %2177
      %2182 = vrot.lane.b32.xlu0 %v2164, 8
      %v2183 = vpop.permute.xlu0 %2182
      %v2186 = vsel %vm441, %v2154, 0
      %2188 = vmatprep.subr.bf16.mxu0 0
      %2189 = vmatpush1.bf16.msra.mxu0 %v2176
      %2190 = vmatprep.subr.bf16.mxu0 0
      %2191 = vmatpush1.bf16.msra.mxu0 %v2178
      %2192 = vmatprep.subr.bf16.mxu0 0
      %2193 = vmatpush1.bf16.msra.mxu0 0
      %2194 = vmatprep.subr.bf16.mxu0 0
      %2195 = vmatpush1.bf16.msra.mxu0 0
      %2196 = vmatprep.subr.bf16.mxu0 0
      %2197 = vmatpush1.bf16.msra.mxu0 0
      %2198 = vmatprep.subr.bf16.mxu0 0
      %2199 = vmatpush1.bf16.msra.mxu0 0
      %2200 = vmatprep.subr.bf16.mxu0 0
      %2201 = vmatpush1.bf16.msra.mxu0 0
      %2202 = vmatprep.subr.bf16.mxu0 0
      %2203 = vmatpush1.bf16.msra.mxu0 0
      %2204 = vmatprep.subr.bf16.mxu0 0
      %2205 = vmatpush1.bf16.msra.mxu0 0
      %2206 = vmatprep.subr.bf16.mxu0 0
      %2207 = vmatpush1.bf16.msra.mxu0 0
      %2208 = vmatprep.subr.bf16.mxu0 0
      %2209 = vmatpush1.bf16.msra.mxu0 0
      %2210 = vmatprep.subr.bf16.mxu0 0
      %2211 = vmatpush1.bf16.msra.mxu0 0
      %2212 = vmatprep.subr.bf16.mxu0 0
      %2213 = vmatpush1.bf16.msra.mxu0 0
      %2214 = vmatprep.subr.bf16.mxu0 0
      %2215 = vmatpush1.bf16.msra.mxu0 0
      %2216 = vmatprep.subr.bf16.mxu0 0
      %2217 = vmatpush1.bf16.msra.mxu0 0
      %2218 = vmatprep.subr.bf16.mxu0 0
      %2219 = vmatpush1.bf16.msra.mxu0 0
      %2220 = vmatprep.mubr.bf16.mxu0 0
      %2221 = vmatmul.mubr.bf16.gmra.mrb[0].mxu0 %v2186
      %v2222 = vpop.f32.mrb[0].mxu0
      %v2223 = vadd.f32 %v2183, %v2222
      %v2224 = vpop.f32.mrb[0].mxu0
      %v2225 = vpop.f32.mrb[0].mxu0
      %v2226 = vadd.f32 %v2183, %v2225
      %v2227 = vpop.f32.mrb[0].mxu0
      %2228 = vdwg.mxu0
      %2231 = vrot.lane.b32.xlu0 %v1068, 5
      %v2232 = vpop.permute.xlu0 %2231
      %2233 = vrot.lane.b32.xlu0 %v1071, 5
      %v2234 = vpop.permute.xlu0 %2233
      %v2237 = vsel %vm269, %v2223, %v2232
      %v2238 = vsel %vm269, %v2226, %v2234
      %2239 = vst.msk [vmem:[%s220] sm:$0xff] %vm1000, %v2237
      %2240 = vst.msk [vmem:[%s220 + $0x8] sm:$0xff] %vm1000, %v2238
      %s2241 = smul.u32 16, %s16
      %p2242 = scmp.lt.s32.totalorder %s2241, 31
      %s2243 = scalar_select %p2242, %s2241, 31
      %s2244 = smul.addr %s2243, 8
      %s2245 = scalar_lea.vmem %s2, %s2244
      %s2246 = smul.u32 2, %s16
      %p2247 = scmp.lt.s32.totalorder %s2246, 3
      %s2248 = scalar_select %p2247, %s2246, 3
      %s2249 = smul.addr %s2248, 8
      %s2250 = scalar_lea.vmem %s3, %s2249
      %s2251 = smul.u32 30, %s16
      %p2252 = scmp.lt.s32.totalorder %s2251, 59
      %s2253 = scalar_select %p2252, %s2251, 59
      %s2254 = smul.addr %s2253, 8
      %s2255 = scalar_lea.vmem %s4, %s2254
      // Predicated region
      $region29: #{forward.1} parent=27 // pred_check
        %p2256 = pneg %p81
      $region30: #{forward.1} parent=27 // pred_check_branch
        %2258 = sbr.rel (%p2256) target = $region32
      $region31: #{forward.1} parent=27 // pred_region
        %s2259 = smul.u32 16, %s16
      $region32: #{forward.1} parent=27 // pred_fallthru
        _
      // Predicated region
      $region33: #{forward.1} parent=27 // pred_check
        %p2260 = pneg %p107
      $region34: #{forward.1} parent=27 // pred_check_branch
        %2262 = sbr.rel (%p2260) target = $region36
      $region35: #{forward.1} parent=27 // pred_region
        %s2263 = smul.u32 2, %s16
      $region36: #{forward.1} parent=27 // pred_fallthru
        _
      // Predicated region
      $region37: #{forward.1} parent=27 // pred_check
        %p2264 = pneg %p133
      $region38: #{forward.1} parent=27 // pred_check_branch
        %2266 = sbr.rel (%p2264) target = $region40
      $region39: #{forward.1} parent=27 // pred_region
        %s2267 = smul.u32 30, %s16
      $region40: #{forward.1} parent=27 // pred_fallthru
        _
    $region28: #{forward.1} parent=5 // pred_fallthru
      _
    %p2268 = scmp.le.s32.totalorder 2, %s11
    // Predicated region
    $region41: #{forward.1} parent=5 // pred_check
      %p2269 = pneg %p2268
    $region42: #{forward.1} parent=5 // pred_check_branch
      %2271 = sbr.rel (%p2269) target = $region44
    $region43: #{forward.1} parent=5 // pred_region
      %s2272 = ssub.s32 %s11, 2
      // Predicated region
      $region45: #{forward.1} parent=43 // pred_check
        %p2273 = pneg %p87
      $region46: #{forward.1} parent=43 // pred_check_branch
        %2275 = sbr.rel (%p2273) target = $region48
      $region47: #{forward.1} parent=43 // pred_region
        %s2276 = smul.u32 16, %s17
        %p2277 = scmp.lt.s32.totalorder %s2276, 31
        %s2278 = scalar_select %p2277, %s2276, 31
        %s2279 = smul.addr %s2278, 8
        %s2280 = scalar_lea.vmem %s2, %s2279
      $region48: #{forward.1} parent=43 // pred_fallthru
        _
      // Predicated region
      $region49: #{forward.1} parent=43 // pred_check
        %p2281 = pneg %p113
      $region50: #{forward.1} parent=43 // pred_check_branch
        %2283 = sbr.rel (%p2281) target = $region52
      $region51: #{forward.1} parent=43 // pred_region
        %s2284 = smul.u32 2, %s17
        %p2285 = scmp.lt.s32.totalorder %s2284, 3
        %s2286 = scalar_select %p2285, %s2284, 3
        %s2287 = smul.addr %s2286, 8
        %s2288 = scalar_lea.vmem %s3, %s2287
      $region52: #{forward.1} parent=43 // pred_fallthru
        _
      // Predicated region
      $region53: #{forward.1} parent=43 // pred_check
        %p2289 = pneg %p139
      $region54: #{forward.1} parent=43 // pred_check_branch
        %2291 = sbr.rel (%p2289) target = $region56
      $region55: #{forward.1} parent=43 // pred_region
        %s2292 = smul.u32 30, %s17
        %p2293 = scmp.lt.s32.totalorder %s2292, 59
        %s2294 = scalar_select %p2293, %s2292, 59
        %s2295 = smul.addr %s2294, 8
        %s2296 = scalar_lea.vmem %s4, %s2295
      $region56: #{forward.1} parent=43 // pred_fallthru
        _
    $region44: #{forward.1} parent=5 // pred_fallthru
      _
  $region6: #{forward.1} parent=0 // loop_footer
    %s15 = sadd.s32 1, %s11
  $region7: #{forward.1} parent=0 // loop_footer_branch
    %10 = sbr.rel target = $region3
  $region8: #{forward.1} parent=0 // loop_exit
    _

</llo_original>
